<compile_context>
chip_gen: v5e
topology: v5e:2x2
jax: 0.10.0
libtpu: 0.0.40
codegen_flags: <defaults>
</compile_context>

<pallas_src>
import functools

import numpy as np

import jax
import jax.numpy as jnp
from jax.experimental import pallas as pl
from jax.experimental.pallas import tpu as pltpu


# ----------------------------------------------------------------------------
# Pallas matmul kernel:  out = act(A @ B + bias)   (A, B bf16; acc f32)
# ----------------------------------------------------------------------------
_ACT_FNS = {
    "none": lambda x: x,
    "relu": lambda x: jnp.maximum(x, 0.0),
    "leaky0.2": lambda x: jnp.where(x >= 0, x, 0.2 * x),
    "leaky0.01": lambda x: jnp.where(x >= 0, x, 0.01 * x),
    "sigmoid": jax.nn.sigmoid,
    "tanh": jnp.tanh,
}


def _round_up(x, m):
    return ((x + m - 1) // m) * m


def _mm_kernel(a_ref, b_ref, bias_ref, o_ref, acc_ref, *, act):
    @pl.when(pl.program_id(2) == 0)
    def _init():
        acc_ref[...] = jnp.zeros_like(acc_ref)

    acc_ref[...] += jnp.dot(a_ref[...], b_ref[...],
                            preferred_element_type=jnp.float32)

    @pl.when(pl.program_id(2) == pl.num_programs(2) - 1)
    def _fin():
        o_ref[...] = _ACT_FNS[act](acc_ref[...] + bias_ref[...]).astype(o_ref.dtype)


def _pick_tiles(M, K, N):
    """Static tile selection.  tk is a multiple of 128 dividing padded K so the
    K-grid is short (few grid steps) without extra K padding; tn is lane-dense
    (>=128) and widened up to 512 for wide outputs."""
    tm = int(min(512, max(16, _round_up(M, 8))))
    if N <= 128:
        tn = 128
    elif N <= 384:
        tn = 256
    else:
        tn = 512
    Kp = _round_up(K, 128)
    if tm <= 64:
        cap = 2048
    elif tm <= 256:
        cap = 1536
    else:
        cap = 1024
    if tn == 512:
        cap = min(cap, 1024)          # bound block VMEM footprint
    q = Kp // 128
    d = 1
    for cand in range(1, q + 1):
        if q % cand == 0 and 128 * cand <= cap:
            d = cand
    tk = 128 * d
    return tm, tk, tn, Kp


def _pallas_matmul(a, b, bias, act):
    M, K = a.shape
    K2, N = b.shape
    assert K == K2
    if bias is None:
        bias = jnp.zeros((N,), jnp.float32)

    tm, tk, tn, Kp = _pick_tiles(M, K, N)
    Mp = _round_up(M, tm)
    Np = _round_up(N, tn)

    ap = jnp.pad(a.astype(jnp.bfloat16), ((0, Mp - M), (0, Kp - K)))
    bp = jnp.pad(b.astype(jnp.bfloat16), ((0, Kp - K), (0, Np - N)))
    biasp = jnp.pad(bias.astype(jnp.float32), (0, Np - N)).reshape(1, Np)

    out = pl.pallas_call(
        functools.partial(_mm_kernel, act=act),
        out_shape=jax.ShapeDtypeStruct((Mp, Np), jnp.float32),
        grid_spec=pltpu.PrefetchScalarGridSpec(
            num_scalar_prefetch=0,
            grid=(Mp // tm, Np // tn, Kp // tk),
            in_specs=[
                pl.BlockSpec((tm, tk), lambda i, j, k: (i, k)),
                pl.BlockSpec((tk, tn), lambda i, j, k: (k, j)),
                pl.BlockSpec((1, tn), lambda i, j, k: (0, j)),
            ],
            out_specs=pl.BlockSpec((tm, tn), lambda i, j, k: (i, j)),
            scratch_shapes=[pltpu.VMEM((tm, tn), jnp.float32)],
        ),
        compiler_params=pltpu.CompilerParams(
            dimension_semantics=("parallel", "parallel", "arbitrary"),
            vmem_limit_bytes=48 * 1024 * 1024),
    )(ap, bp, biasp)
    return out[:M, :N]


@functools.partial(jax.jit, static_argnames=("act",))
def matmul(a, b, bias=None, *, act="none"):
    return _pallas_matmul(a, b, bias, act)


# ----------------------------------------------------------------------------
# Convolutions (PyTorch semantics) built on the Pallas matmul kernel.
# Weights are pre-reshaped at init to bf16 matrices of shape (Kh*Kw*Cin, Cout).
# ----------------------------------------------------------------------------
@functools.partial(jax.jit,
                   static_argnames=("kh", "kw", "stride", "padding",
                                    "dilation", "act"))
def _conv2d_impl(x, wmat, bias, *, kh, kw, stride, padding, dilation, act):
    N, H, W, Cin = x.shape
    _, Cout = wmat.shape
    s, d, p = stride, dilation, padding
    Ho = (H + 2 * p - d * (kh - 1) - 1) // s + 1
    Wo = (W + 2 * p - d * (kw - 1) - 1) // s + 1

    xb = x.astype(jnp.bfloat16)
    taps = []
    kept = None
    if 2 * p < H:
        # Cheap pad + strided-slice tap extraction (small padding).
        xp = jnp.pad(xb, ((0, 0), (p, p), (p, p), (0, 0)))
        for ih in range(kh):
            for iw in range(kw):
                taps.append(xp[:, ih * d: ih * d + (Ho - 1) * s + 1: s,
                                  iw * d: iw * d + (Wo - 1) * s + 1: s, :])
    else:
        # Heavy padding / dilation on a tiny map: gather taps with clip + mask
        # instead of a huge zero-padded input.  Taps that land entirely in the
        # zero padding are dropped (together with their weight rows) at trace
        # time, which shrinks K up to 9x for the bottleneck convs.
        kept = []
        rb = np.arange(Ho) * s - p
        cb = np.arange(Wo) * s - p
        for ih in range(kh):
            r = rb + ih * d
            rm = (r >= 0) & (r < H)
            if not rm.any():
                continue
            rc = np.clip(r, 0, H - 1)
            xr = xb[:, rc, :, :]
            if not rm.all():
                xr = jnp.where(jnp.asarray(rm)[None, :, None, None], xr, 0)
            for iw in range(kw):
                c = cb + iw * d
                cm = (c >= 0) & (c < W)
                if not cm.any():
                    continue
                cc = np.clip(c, 0, W - 1)
                t = xr[:, :, cc, :]
                if not cm.all():
                    t = jnp.where(jnp.asarray(cm)[None, None, :, None], t, 0)
                taps.append(t)
                kept.append(ih * kw + iw)
        if not kept:
            raise ValueError("conv window never touches the input")
        if len(kept) < kh * kw:
            wmat = jnp.concatenate(
                [wmat[t * Cin:(t + 1) * Cin, :] for t in kept], axis=0)

    k_taps = kh * kw if kept is None else len(kept)
    patches = jnp.concatenate(taps, axis=-1).reshape(N * Ho * Wo, k_taps * Cin)
    y = _pallas_matmul(patches, wmat, bias, act)
    return y.reshape(N, Ho, Wo, Cout)


def conv2d(x, wmat, bias, kh, kw, *, stride=1, padding=0, dilation=1, act="none"):
    return _conv2d_impl(x, wmat, bias, kh=kh, kw=kw, stride=stride,
                        padding=padding, dilation=dilation, act=act)


# ----------------------------------------------------------------------------
# Norms / pointwise helpers (JAX glue, f32)
# ----------------------------------------------------------------------------
def leaky(x, slope):
    return jnp.where(x >= 0, x, slope * x)


@jax.jit
def batchnorm(x, p, eps=1e-5):
    # Fresh nn.BatchNorm2d is in training mode -> normalize with (biased) batch stats.
    mean = jnp.mean(x, axis=(0, 1, 2), keepdims=True)
    var = jnp.mean((x - mean) ** 2, axis=(0, 1, 2), keepdims=True)
    return (x - mean) * jax.lax.rsqrt(var + eps) * p["g"] + p["b"]


@jax.jit
def instancenorm(x, eps=1e-5):
    # nn.InstanceNorm2d(affine=False)
    mean = jnp.mean(x, axis=(1, 2), keepdims=True)
    var = jnp.mean((x - mean) ** 2, axis=(1, 2), keepdims=True)
    return (x - mean) * jax.lax.rsqrt(var + eps)


def pixel_shuffle(x, r):
    N, H, W, C = x.shape
    c = C // (r * r)
    x = x.reshape(N, H, W, c, r, r)
    x = jnp.transpose(x, (0, 1, 4, 2, 5, 3))
    return x.reshape(N, H * r, W * r, c)


# ----------------------------------------------------------------------------
# Blocks
# ----------------------------------------------------------------------------
def down_block(p, x):
    if p["bn"] is None:
        return conv2d(x, p["w"], None, 4, 4, stride=2, padding=1, act="leaky0.2")
    y = conv2d(x, p["w"], None, 4, 4, stride=2, padding=1, act="none")
    return leaky(batchnorm(y, p["bn"]), 0.2)


def residual_block(p, x):
    y = conv2d(x, p["w1"], None, 3, 3, stride=1, padding=1, act="none")
    y = jnp.maximum(batchnorm(y, p["bn1"]), 0.0)
    y = conv2d(y, p["w2"], None, 3, 3, stride=1, padding=1, act="none")
    y = batchnorm(y, p["bn2"]) + x
    return jnp.maximum(y, 0.0)


def sdown_block(p, x, dilation, norm):
    if not norm:
        return conv2d(x, p["w"], None, 3, 3, stride=2, padding=dilation,
                      dilation=dilation, act="leaky0.2")
    y = conv2d(x, p["w"], None, 3, 3, stride=2, padding=dilation,
               dilation=dilation, act="none")
    return leaky(instancenorm(y), 0.2)


def up_block(p, x):
    y = conv2d(x, p["w"], None, 3, 3, stride=1, padding=1, act="none")
    y = pixel_shuffle(y, 2)
    y = batchnorm(y, p["bn"])
    # TODO(synk): nn.Dropout(0.5) (train-mode random mask) treated as identity (eval semantics).
    return leaky(y, 0.01)


def self_attention(p, x):
    # Fused q/k/v projection (one Pallas matmul); tiny (HW<=64) attention math in jnp.
    N, H, W, C = x.shape
    xf = x.reshape(N * H * W, C)
    qkv = matmul(xf, p["qkv_w"], p["qkv_b"], act="none")
    c8 = C // 8
    q = qkv[:, :c8].reshape(N, H * W, c8)
    k = qkv[:, c8:2 * c8].reshape(N, H * W, c8)
    v = qkv[:, 2 * c8:].reshape(N, H * W, C)
    energy = jnp.einsum("nic,njc->nij", q, k)
    att = jax.nn.softmax(energy, axis=-1)
    out = jnp.einsum("nij,njc->nic", att, v).reshape(N, H, W, C)
    return p["gamma"] * out + x


def spatial_attention(p, x):
    avg = jnp.mean(x, axis=-1, keepdims=True)
    mx = jnp.max(x, axis=-1, keepdims=True)
    y = jnp.concatenate([avg, mx], axis=-1)
    return conv2d(y, p["w"], None, 7, 7, stride=1, padding=3, act="sigmoid")


def convlstm_cell(p, x, h, c):
    # i/f/c/o gate convolutions fused into one Pallas matmul (weights concatenated
    # along Cout at init); per-gate nonlinearities applied on the tiny 1x1 output.
    comb = jnp.concatenate([x, h], axis=-1)
    gates = conv2d(comb, p["w"], p["b"], 3, 3, stride=1, padding=1, act="none")
    i, f, g, o = jnp.split(gates, 4, axis=-1)
    i = jax.nn.sigmoid(i)
    f = jax.nn.sigmoid(f)
    g = jnp.tanh(g)
    o = jax.nn.sigmoid(o)
    c_new = f * c + i * g
    h_new = o * jnp.tanh(c_new)
    return h_new, c_new


def spectrogram_processor(p, x):
    x = conv2d(x, p["conv1"]["w"], p["conv1"]["b"], 3, 3, stride=1, padding=1,
               act="relu")
    for i, dl in enumerate((2, 4, 8, 16, 32, 64, 128, 256)):
        x = sdown_block(p["down"][i], x, dl, norm=(i < 7))
    x = self_attention(p["sa"][0], x)
    x = self_attention(p["sa"][1], x)
    return x


def up8_block(p, x):
    # ConvTranspose2d(128,32,4,2,1) + LeakyReLU  ==  equivalent 3x3 stride-1 conv
    # (weights rearranged at init) + fused leaky + PixelShuffle(2).
    y = conv2d(x, p["tw"], p["tb"], 3, 3, stride=1, padding=1, act="leaky0.01")
    y = pixel_shuffle(y, 2)
    return conv2d(y, p["cw"], None, 5, 5, stride=1, padding=2, act="tanh")


# ----------------------------------------------------------------------------
# Full forward (NCHW in / NCHW out, like the PyTorch module)
# ----------------------------------------------------------------------------
def unet_forward(params, x_nchw, hidden_state=None):
    x = jnp.transpose(x_nchw, (0, 2, 3, 1)).astype(jnp.float32)   # -> NHWC
    spect = x[..., 0:1]
    frame = x[..., 1:4]

    d = []
    y = frame
    for i in range(8):
        y = down_block(params["down"][i], y)
        if i < 7:
            y = residual_block(params["res"][i], y)
        d.append(y)
    d1, d2, d3, d4, d5, d6, d7, d8 = d

    sf = spectrogram_processor(params["spec"], spect)
    combined = jnp.concatenate([d8, sf], axis=-1)

    if hidden_state is None:
        B, Hc, Wc = combined.shape[0], combined.shape[1], combined.shape[2]
        h = jnp.zeros((B, Hc, Wc, 512), jnp.float32)
        c = jnp.zeros((B, Hc, Wc, 512), jnp.float32)
    else:
        h, c = hidden_state
    h, c = convlstm_cell(params["lstm"], combined, h, c)

    u1 = up_block(params["up"][0], h)
    u1 = u1 * spatial_attention(params["spa"][0], u1)
    u1 = u1 * spatial_attention(params["spa"][1], u1)
    u1 = u1 * spatial_attention(params["spa"][2], u1)
    # TODO(synk): skip-connection concats are still materialized (split-K into the
    # consuming conv would avoid them; modest win at these resolutions).
    u2 = up_block(params["up"][1],
                  jnp.concatenate([u1, self_attention(params["satt"][0], d7)], -1))
    u3 = up_block(params["up"][2],
                  jnp.concatenate([u2, self_attention(params["satt"][1], d6)], -1))
    u4 = up_block(params["up"][3],
                  jnp.concatenate([u3, self_attention(params["satt"][2], d5)], -1))
    u5 = up_block(params["up"][4], jnp.concatenate([u4, d4], -1))
    u6 = up_block(params["up"][5], jnp.concatenate([u5, d3], -1))
    u7 = up_block(params["up"][6], jnp.concatenate([u6, d2], -1))
    u8 = up8_block(params["up8"], jnp.concatenate([u7, d1], -1))

    out = jnp.transpose(u8, (0, 3, 1, 2))
    h_out = jnp.transpose(h, (0, 3, 1, 2))
    c_out = jnp.transpose(c, (0, 3, 1, 2))
    return out, (h_out, c_out)


# ----------------------------------------------------------------------------
# Deterministic parameter initialization.  Conv weights are generated and then
# stored ONCE as bf16 matmul-ready matrices of shape (Kh*Kw*Cin, Cout).
# ----------------------------------------------------------------------------
def init_params(key):
    ks = iter(jax.random.split(key, 256))

    def wmat(cin, cout, kh, kw, std=0.02):
        return (jax.random.normal(next(ks), (kh * kw * cin, cout), jnp.float32)
                * std).astype(jnp.bfloat16)

    def zeros(c):
        return jnp.zeros((c,), jnp.float32)

    def bn(c):
        return {"g": jnp.ones((c,), jnp.float32), "b": jnp.zeros((c,), jnp.float32)}

    def sa(c):
        c8 = c // 8
        return {"qkv_w": wmat(c, 2 * c8 + c, 1, 1),
                "qkv_b": zeros(2 * c8 + c),
                "gamma": jnp.zeros((1,), jnp.float32)}   # gamma init 0, as in the module

    def convT_as_conv_wmat(cin, cout, std=0.02):
        # Equivalent 3x3/stride-1/pad-1 conv (producing cout*4 channels, then
        # PixelShuffle(2)) for ConvTranspose2d(cin, cout, k=4, s=2, p=1).
        w = jax.random.normal(next(ks), (cin, cout, 4, 4), jnp.float32) * std
        W = jnp.zeros((cout * 4, cin, 3, 3), jnp.float32)
        tapmap = {(0, 0): 3, (0, 1): 1, (1, 1): 2, (1, 2): 0}
        oc_base = jnp.arange(cout) * 4
        for a in range(2):
            for b in range(2):
                for dr in range(3):
                    if (a, dr) not in tapmap:
                        continue
                    for dc in range(3):
                        if (b, dc) not in tapmap:
                            continue
                        khh, kww = tapmap[(a, dr)], tapmap[(b, dc)]
                        W = W.at[oc_base + a * 2 + b, :, dr, dc].set(w[:, :, khh, kww].T)
        return jnp.transpose(W, (2, 3, 1, 0)).reshape(9 * cin, cout * 4).astype(jnp.bfloat16)

    down_cfg = [(3, 64, False), (64, 128, True), (128, 256, True), (256, 512, True),
                (512, 512, True), (512, 512, True), (512, 512, True), (512, 512, False)]
    downs = [{"w": wmat(ci, co, 4, 4), "bn": bn(co) if use_bn else None}
             for ci, co, use_bn in down_cfg]
    res = [{"w1": wmat(c, c, 3, 3), "bn1": bn(c),
            "w2": wmat(c, c, 3, 3), "bn2": bn(c)}
           for c in (64, 128, 256, 512, 512, 512, 512)]
    spec_down_cfg = [(64, 256), (256, 512)] + [(512, 512)] * 6
    spec = {"conv1": {"w": wmat(1, 64, 3, 3), "b": zeros(64)},
            "down": [{"w": wmat(ci, co, 3, 3)} for ci, co in spec_down_cfg],
            "sa": [sa(512), sa(512)]}
    # ConvLSTM: i/f/c/o gates fused -> one (9*1536, 4*512) weight matrix.
    lstm = {"w": wmat(1536, 4 * 512, 3, 3), "b": zeros(4 * 512)}
    up_cfg = [(512, 512), (1024, 512), (1024, 512), (1024, 512),
              (1024, 256), (512, 128), (256, 64)]
    ups = [{"w": wmat(ci, co * 4, 3, 3), "bn": bn(co)} for ci, co in up_cfg]
    up8 = {"tw": convT_as_conv_wmat(128, 32),
           "tb": jnp.repeat(zeros(32), 4),          # ConvTranspose2d bias, per phase
           "cw": wmat(32, 3, 5, 5)}
    satt = [sa(512) for _ in range(3)]
    spa = [{"w": wmat(2, 1, 7, 7)} for _ in range(3)]
    # Note: dilated1-5 and SpectrogramProcessor.spatial_attention1/2 are defined in the
    # PyTorch module but never used in forward(), so they are not instantiated here.
    return {"down": downs, "res": res, "spec": spec, "lstm": lstm,
            "up": ups, "up8": up8, "satt": satt, "spa": spa}


if __name__ == "__main__":
    key = jax.random.PRNGKey(0)
    pkey, xkey = jax.random.split(key)
    params = init_params(pkey)
    # The architecture applies 8 stride-2 halvings down to a 1x1 bottleneck, so
    # 256 is the smallest spatial size the PyTorch forward accepts; batch=1 keeps
    # the example as small as the module allows.
    x = jax.random.normal(xkey, (1, 4, 256, 256), jnp.float32)
    out, (h, c) = unet_forward(params, x)
    out, h, c = jax.block_until_ready((out, h, c))
    assert out.shape == (1, 3, 256, 256)
    assert h.shape == (1, 512, 1, 1) and c.shape == (1, 512, 1, 1)
    assert bool(jnp.isfinite(out).all())
    print("KERNEL_OK")
</pallas_src>

<mosaic_0001>
module attributes {stable_mosaic.version = 11 : i64} {
  func.func @_mm_kernel(%arg0: i32, %arg1: i32, %arg2: i32, %arg3: memref<512x128xbf16, #tpu.memory_space<vmem>>, %arg4: memref<128x128xbf16, #tpu.memory_space<vmem>>, %arg5: memref<1x128xf32, #tpu.memory_space<vmem>>, %arg6: memref<512x128xf32, #tpu.memory_space<vmem>>, %arg7: memref<512x128xf32, #tpu.memory_space<vmem>>) attributes {dimension_semantics = [#tpu.dimension_semantics<parallel>, #tpu.dimension_semantics<parallel>, #tpu.dimension_semantics<arbitrary>], iteration_bounds = array<i64: 32, 1, 1>, scalar_prefetch = 0 : i64, scratch_operands = 1 : i64, tpu.core_type = #tpu.core_type<tc>, window_params = [{transform_indices = @transform_0, window_bounds = array<i64: 512, 128>}, {transform_indices = @transform_1, window_bounds = array<i64: 128, 128>}, {transform_indices = @transform_2, window_bounds = array<i64: 1, 128>}, {transform_indices = @transform_3, window_bounds = array<i64: 512, 128>}]} {
    %c0_i32 = arith.constant 0 : i32
    %0 = arith.cmpi eq, %arg2, %c0_i32 : i32
    %1 = arith.extui %0 : i1 to i32
    %c0_i32_0 = arith.constant 0 : i32
    %2 = arith.cmpi ne, %1, %c0_i32_0 : i32
    scf.if %2 {
      %cst_10 = arith.constant 0.000000e+00 : f32
      %12 = vector.broadcast %cst_10 : f32 to vector<512x128xf32>
      %c0_11 = arith.constant 0 : index
      %c0_12 = arith.constant 0 : index
      %13 = vector.load %arg7[%c0_11, %c0_12] : memref<512x128xf32, #tpu.memory_space<vmem>>, vector<512x128xf32>
      tpu.vector_store %arg7[%c0_11, %c0_12], %12 {strides = array<i32>} : memref<512x128xf32, #tpu.memory_space<vmem>>, vector<512x128xf32>,
    } else {
    }
    %c0 = arith.constant 0 : index
    %c0_1 = arith.constant 0 : index
    %3 = vector.load %arg7[%c0, %c0_1] : memref<512x128xf32, #tpu.memory_space<vmem>>, vector<512x128xf32>
    %c0_2 = arith.constant 0 : index
    %c0_3 = arith.constant 0 : index
    %4 = vector.load %arg3[%c0_2, %c0_3] : memref<512x128xbf16, #tpu.memory_space<vmem>>, vector<512x128xbf16>
    %c0_4 = arith.constant 0 : index
    %c0_5 = arith.constant 0 : index
    %5 = vector.load %arg4[%c0_4, %c0_5] : memref<128x128xbf16, #tpu.memory_space<vmem>>, vector<128x128xbf16>
    %cst = arith.constant dense<0.000000e+00> : vector<512x128xf32>
    %6 = tpu.matmul %4, %5, %cst {dimension_numbers = #tpu.dot_dimension_numbers<[1], [0], [0], [1], [0, 0, 1, 1], [], []>} : vector<512x128xbf16>, vector<128x128xbf16>, vector<512x128xf32> -> vector<512x128xf32>
    %7 = arith.addf %3, %6 : vector<512x128xf32>
    %c0_6 = arith.constant 0 : index
    %c0_7 = arith.constant 0 : index
    %8 = vector.load %arg7[%c0_6, %c0_7] : memref<512x128xf32, #tpu.memory_space<vmem>>, vector<512x128xf32>
    tpu.vector_store %arg7[%c0_6, %c0_7], %7 {strides = array<i32>} : memref<512x128xf32, #tpu.memory_space<vmem>>, vector<512x128xf32>,
    %c0_i32_8 = arith.constant 0 : i32
    %9 = arith.cmpi eq, %arg2, %c0_i32_8 : i32
    %10 = arith.extui %9 : i1 to i32
    %c0_i32_9 = arith.constant 0 : i32
    %11 = arith.cmpi ne, %10, %c0_i32_9 : i32
    scf.if %11 {
      %c0_10 = arith.constant 0 : index
      %c0_11 = arith.constant 0 : index
      %12 = vector.load %arg7[%c0_10, %c0_11] : memref<512x128xf32, #tpu.memory_space<vmem>>, vector<512x128xf32>
      %c0_12 = arith.constant 0 : index
      %c0_13 = arith.constant 0 : index
      %13 = vector.load %arg5[%c0_12, %c0_13] : memref<1x128xf32, #tpu.memory_space<vmem>>, vector<1x128xf32>
      %14 = vector.broadcast %13 : vector<1x128xf32> to vector<512x128xf32>
      %15 = arith.addf %12, %14 : vector<512x128xf32>
      %cst_14 = arith.constant 0.000000e+00 : f32
      %16 = vector.broadcast %cst_14 : f32 to vector<512x128xf32>
      %17 = arith.cmpf oge, %15, %16 : vector<512x128xf32>
      %cst_15 = arith.constant 2.000000e-01 : f32
      %18 = vector.broadcast %cst_15 : f32 to vector<512x128xf32>
      %19 = arith.mulf %18, %15 : vector<512x128xf32>
      %20 = arith.select %17, %15, %19 : vector<512x128xi1>, vector<512x128xf32>
      %c0_16 = arith.constant 0 : index
      %c0_17 = arith.constant 0 : index
      %21 = vector.load %arg6[%c0_16, %c0_17] : memref<512x128xf32, #tpu.memory_space<vmem>>, vector<512x128xf32>
      tpu.vector_store %arg6[%c0_16, %c0_17], %20 {strides = array<i32>} : memref<512x128xf32, #tpu.memory_space<vmem>>, vector<512x128xf32>,
    } else {
    }
    return
  }
  func.func @transform_0(%arg0: i32, %arg1: i32, %arg2: i32) -> (i32, i32) {
    %c0_i32 = arith.constant 0 : i32
    return %arg0, %arg2 : i32, i32
  }
  func.func @transform_1(%arg0: i32, %arg1: i32, %arg2: i32) -> (i32, i32) {
    %c0_i32 = arith.constant 0 : i32
    return %arg2, %arg1 : i32, i32
  }
  func.func @transform_2(%arg0: i32, %arg1: i32, %arg2: i32) -> (i32, i32) {
    %c0_i32 = arith.constant 0 : i32
    %c0_i32_0 = arith.constant 0 : i32
    return %c0_i32, %arg1 : i32, i32
  }
  func.func @transform_3(%arg0: i32, %arg1: i32, %arg2: i32) -> (i32, i32) {
    %c0_i32 = arith.constant 0 : i32
    return %arg0, %arg1 : i32, i32
  }
}

</mosaic_0001>

<llo_original>
// kernel: _conv2d_impl.1
$region0: #{_conv2d_impl.1}
  #allocation0 [shape = 'u32[]', space=smem, size = 0x4, offset = 0x4, fixed_abs, tag = 'smem constant byte address 0x4 - core index']
  #allocation1 [shape = 'u32[72,128]{1,0:T(1,128)}', space=vmem, size = 0x9000, scoped, tag = 'internal scratch']
  #allocation2 [shape = 'f32[512,128]{1,0:T(8,128)}', space=vmem, size = 0x40000, scoped, tag = 'scratch operand']
  %s0 = inlined_call_operand.vmem [shape: bf16[16384,128], index: 0, kind: input, shape index: {}]
  %s1 = inlined_call_operand.vmem [shape: bf16[128,128], index: 1, kind: input, shape index: {}]
  %s2 = inlined_call_operand.vmem [shape: f32[1,128], index: 2, kind: input, shape index: {}]
  %s3 = inlined_call_operand.vmem [shape: f32[16384,128], index: 3, kind: output, shape index: {}]
  %s4 = sld [smem:[#allocation0]]
  $region53: #{_conv2d_impl.1} parent=0
    _
  %s6 = ssub.s32 1, %s4
  %s7 = scalar_select 0, %s6, %s4
  loop: start=0, step=1, limit=34
  $region2: #{_conv2d_impl.1} parent=0 // loop_pre_header
    _
  $region3: #{_conv2d_impl.1} parent=0 // loop_header
    %s9 = sphi 0, %s13
    %p10 = scmp.ge.s32.totalorder %s9, 34
    %s16 = sphi 0, %s35
    %s17 = sphi 0, %s31
    %s18 = sphi 0, %s27
    %s19 = sphi 0, %s16
    %s20 = sphi 0, %s17
    %s21 = sphi 0, %s18
    %s22 = sphi 0, %s19
    %s23 = sphi 0, %s20
    %s24 = sphi 0, %s21
    %s40 = sphi 0, %s42
    %s43 = sphi 0, %s40
    %s44 = sphi 0, %s43
    %s60 = sphi 0, %s44
    %s68 = sphi 0, %s70
    %s71 = sphi 0, %s68
    %s72 = sphi 0, %s71
    %s88 = sphi 0, %s72
    %s94 = sphi 0, %s96
    %s97 = sphi 0, %s94
    %s98 = sphi 0, %s97
    %s114 = sphi 0, %s98
    %s122 = sphi 0, %s124
    %s125 = sphi 0, %s122
    %s126 = sphi 0, %s125
    %s142 = sphi 0, %s126
  $region4: #{_conv2d_impl.1} parent=0 // loop_header_branch
    %12 = sbr.rel (%p10) target = $region8
  $region5: #{_conv2d_impl.1} parent=0 // loop_body
    %s14 = ssub.s32 %s9, 1
    %s15 = ssub.s32 %s9, 2
    %s25 = sadd.s32 1, %s18
    %p26 = scmp.ge.s32.totalorder %s25, 1
    %s27 = scalar_select %p26, 0, %s25
    %s28 = sadd.s32 1, %s17
    %s29 = scalar_select %p26, %s28, %s17
    %p30 = scmp.ge.s32.totalorder %s29, 1
    %s31 = scalar_select %p30, 0, %s29
    %s32 = sadd.s32 1, %s16
    %s33 = scalar_select %p30, %s32, %s16
    %p34 = scmp.ge.s32.totalorder %s33, 32
    %s35 = scalar_select %p34, 0, %s33
    %s36 = ssub.s32 %s16, %s35
    %s37 = ssub.s32 %s18, %s27
    %s38 = sor.u32 %s36, %s37
    %p39 = scmp.eq.s32.totalorder %s38, 0
    %s41 = sadd.s32 %s40, 1
    %s42 = scalar_select %p39, %s40, %s41
    %p45 = pneg %p39
    %p46 = scmp.eq.s32.totalorder %s9, 31
    %p47 = por %p45, %p46
    %p48 = scmp.ne.s32.totalorder %s40, %s43
    %p49 = scmp.eq.s32.totalorder %s9, 0
    %p50 = por %p48, %p49
    %p51 = scmp.ne.s32.totalorder %s40, %s43
    %p52 = scmp.eq.s32.totalorder %s14, 31
    %p53 = por %p51, %p52
    %p54 = scmp.ne.s32.totalorder %s43, %s44
    %p55 = scmp.eq.s32.totalorder %s14, 0
    %p56 = por %p54, %p55
    %p57 = scmp.ne.s32.totalorder %s43, %s44
    %p58 = scmp.eq.s32.totalorder %s15, 31
    %p59 = por %p57, %p58
    %p61 = scmp.ne.s32.totalorder %s44, %s60
    %p62 = scmp.eq.s32.totalorder %s15, 0
    %p63 = por %p61, %p62
    %s64 = ssub.s32 %s18, %s27
    %s65 = ssub.s32 %s17, %s31
    %s66 = sor.u32 %s64, %s65
    %p67 = scmp.eq.s32.totalorder %s66, 0
    %s69 = sadd.s32 %s68, 1
    %s70 = scalar_select %p67, %s68, %s69
    %p73 = pneg %p67
    %p74 = scmp.eq.s32.totalorder %s9, 31
    %p75 = por %p73, %p74
    %p76 = scmp.ne.s32.totalorder %s68, %s71
    %p77 = scmp.eq.s32.totalorder %s9, 0
    %p78 = por %p76, %p77
    %p79 = scmp.ne.s32.totalorder %s68, %s71
    %p80 = scmp.eq.s32.totalorder %s14, 31
    %p81 = por %p79, %p80
    %p82 = scmp.ne.s32.totalorder %s71, %s72
    %p83 = scmp.eq.s32.totalorder %s14, 0
    %p84 = por %p82, %p83
    %p85 = scmp.ne.s32.totalorder %s71, %s72
    %p86 = scmp.eq.s32.totalorder %s15, 31
    %p87 = por %p85, %p86
    %p89 = scmp.ne.s32.totalorder %s72, %s88
    %p90 = scmp.eq.s32.totalorder %s15, 0
    %p91 = por %p89, %p90
    %s92 = ssub.s32 %s17, %s31
    %p93 = scmp.eq.s32.totalorder %s92, 0
    %s95 = sadd.s32 %s94, 1
    %s96 = scalar_select %p93, %s94, %s95
    %p99 = pneg %p93
    %p100 = scmp.eq.s32.totalorder %s9, 31
    %p101 = por %p99, %p100
    %p102 = scmp.ne.s32.totalorder %s94, %s97
    %p103 = scmp.eq.s32.totalorder %s9, 0
    %p104 = por %p102, %p103
    %p105 = scmp.ne.s32.totalorder %s94, %s97
    %p106 = scmp.eq.s32.totalorder %s14, 31
    %p107 = por %p105, %p106
    %p108 = scmp.ne.s32.totalorder %s97, %s98
    %p109 = scmp.eq.s32.totalorder %s14, 0
    %p110 = por %p108, %p109
    %p111 = scmp.ne.s32.totalorder %s97, %s98
    %p112 = scmp.eq.s32.totalorder %s15, 31
    %p113 = por %p111, %p112
    %p115 = scmp.ne.s32.totalorder %s98, %s114
    %p116 = scmp.eq.s32.totalorder %s15, 0
    %p117 = por %p115, %p116
    %s118 = ssub.s32 %s16, %s35
    %s119 = ssub.s32 %s17, %s31
    %s120 = sor.u32 %s118, %s119
    %p121 = scmp.eq.s32.totalorder %s120, 0
    %s123 = sadd.s32 %s122, 1
    %s124 = scalar_select %p121, %s122, %s123
    %p127 = pneg %p121
    %p128 = scmp.eq.s32.totalorder %s9, 31
    %p129 = por %p127, %p128
    %p130 = scmp.ne.s32.totalorder %s122, %s125
    %p131 = scmp.eq.s32.totalorder %s9, 0
    %p132 = por %p130, %p131
    %p133 = scmp.ne.s32.totalorder %s122, %s125
    %p134 = scmp.eq.s32.totalorder %s14, 31
    %p135 = por %p133, %p134
    %p136 = scmp.ne.s32.totalorder %s125, %s126
    %p137 = scmp.eq.s32.totalorder %s14, 0
    %p138 = por %p136, %p137
    %p139 = scmp.ne.s32.totalorder %s125, %s126
    %p140 = scmp.eq.s32.totalorder %s15, 31
    %p141 = por %p139, %p140
    %p143 = scmp.ne.s32.totalorder %s126, %s142
    %p144 = scmp.eq.s32.totalorder %s15, 0
    %p145 = por %p143, %p144
    %p146 = scmp.le.s32.totalorder 1, %s9
    %p147 = scmp.lt.s32.totalorder %s9, 33
    %p148 = pnand %p146, %p147
    %p149 = pneg %p148
    // Predicated region
    $region9: #{_conv2d_impl.1} parent=5 // pred_check
      _
    $region10: #{_conv2d_impl.1} parent=5 // pred_check_branch
      %151 = sbr.rel (%p148) target = $region12
    $region11: #{_conv2d_impl.1} parent=5 // pred_region
      %s152 = ssub.s32 %s9, 1
      // Predicated region
      $region13: #{_conv2d_impl.1} parent=11 // pred_check
        %p153 = pneg %p84
      $region14: #{_conv2d_impl.1} parent=11 // pred_check_branch
        %155 = sbr.rel (%p153) target = $region16
      $region15: #{_conv2d_impl.1} parent=11 // pred_region
        %s156 = smul.u32 16, %s21
        %p157 = scmp.lt.s32.totalorder %s156, 15
        %s158 = scalar_select %p157, %s156, 15
        %p159 = scmp.lt.s32.totalorder %s20, 0
        %s160 = scalar_select %p159, %s20, 0
        %s161 = sadd.s32 %s160, %s158
        %s162 = smul.addr %s161, 4
        %s163 = scalar_lea.vmem %s1, %s162
        %s164 = smul.u32 16, %s21
      $region16: #{_conv2d_impl.1} parent=11 // pred_fallthru
        _
      // Predicated region
      $region17: #{_conv2d_impl.1} parent=11 // pred_check
        %p165 = pneg %p110
      $region18: #{_conv2d_impl.1} parent=11 // pred_check_branch
        %167 = sbr.rel (%p165) target = $region20
      $region19: #{_conv2d_impl.1} parent=11 // pred_region
        %p168 = scmp.lt.s32.totalorder %s20, 0
        %s169 = scalar_select %p168, %s20, 0
        %s170 = scalar_lea.vmem %s2, %s169
      $region20: #{_conv2d_impl.1} parent=11 // pred_fallthru
        _
    $region12: #{_conv2d_impl.1} parent=5 // pred_fallthru
      _
    %p171 = scmp.lt.s32.totalorder %s9, 32
    // Predicated region
    $region21: #{_conv2d_impl.1} parent=5 // pred_check
      %p172 = pneg %p171
    $region22: #{_conv2d_impl.1} parent=5 // pred_check_branch
      %174 = sbr.rel (%p172) target = $region24
    $region23: #{_conv2d_impl.1} parent=5 // pred_region
      // Predicated region
      $region25: #{_conv2d_impl.1} parent=23 // pred_check
        %p175 = pneg %p50
      $region26: #{_conv2d_impl.1} parent=23 // pred_check_branch
        %177 = sbr.rel (%p175) target = $region28
      $region27: #{_conv2d_impl.1} parent=23 // pred_region
        %s178 = smul.u32 64, %s16
        %p179 = scmp.lt.s32.totalorder %s178, 2047
        %s180 = scalar_select %p179, %s178, 2047
        %p181 = scmp.lt.s32.totalorder %s18, 0
        %s182 = scalar_select %p181, %s18, 0
        %s183 = sadd.s32 %s182, %s180
        %s184 = smul.addr %s183, 4
        %s185 = scalar_lea.vmem %s0, %s184
        %s186 = smul.u32 64, %s16
      $region28: #{_conv2d_impl.1} parent=23 // pred_fallthru
        _
    $region24: #{_conv2d_impl.1} parent=5 // pred_fallthru
      _
    %p187 = scmp.le.s32.totalorder 1, %s9
    %p188 = scmp.lt.s32.totalorder %s9, 33
    %p189 = pnand %p187, %p188
    %p190 = pneg %p189
    // Predicated region
    $region29: #{_conv2d_impl.1} parent=5 // pred_check
      _
    $region30: #{_conv2d_impl.1} parent=5 // pred_check_branch
      %192 = sbr.rel (%p189) target = $region32
    $region31: #{_conv2d_impl.1} parent=5 // pred_region
      %s193 = ssub.s32 %s9, 1
      %s194 = smul.u32 64, %s19
      %p195 = scmp.lt.s32.totalorder %s194, 2047
      %s196 = scalar_select %p195, %s194, 2047
      %p197 = scmp.lt.s32.totalorder %s21, 0
      %s198 = scalar_select %p197, %s21, 0
      %s199 = sadd.s32 %s198, %s196
      %s200 = smul.addr %s199, 4
      %s201 = scalar_lea.vmem %s0, %s200
      %p202 = pneg %p56
      %p203 = pneg %p53
      %s204 = smul.u32 16, %s21
      %p205 = scmp.lt.s32.totalorder %s204, 15
      %s206 = scalar_select %p205, %s204, 15
      %p207 = scmp.lt.s32.totalorder %s20, 0
      %s208 = scalar_select %p207, %s20, 0
      %s209 = sadd.s32 %s208, %s206
      %s210 = smul.addr %s209, 4
      %s211 = scalar_lea.vmem %s1, %s210
      %p212 = pneg %p84
      %p213 = pneg %p81
      %p214 = scmp.lt.s32.totalorder %s20, 0
      %s215 = scalar_select %p214, %s20, 0
      %s216 = scalar_lea.vmem %s2, %s215
      %p217 = pneg %p110
      %p218 = pneg %p107
      %p219 = pneg %p138
      %p220 = pneg %p135
      %s221 = smul.u32 64, %s19
      %p222 = scmp.lt.s32.totalorder %s221, 2047
      %s223 = scalar_select %p222, %s221, 2047
      %p224 = scmp.lt.s32.totalorder %s20, 0
      %s225 = scalar_select %p224, %s20, 0
      %s226 = sadd.s32 %s225, %s223
      %s227 = smul.addr %s226, 8
      %s228 = scalar_lea.vmem %s3, %s227
      %s229 = smul.u32 64, %s19
      %p230 = scmp.lt.s32.totalorder %s229, 2047
      %s231 = scalar_select %p230, %s229, 2047
      %p232 = scmp.lt.s32.totalorder %s21, 0
      %s233 = scalar_select %p232, %s21, 0
      %s234 = sadd.s32 %s233, %s231
      %s235 = smul.addr %s234, 4
      %s236 = scalar_lea.vmem %s0, %s235
      %s237 = smul.u32 64, %s19
      %s238 = smul.u32 16, %s21
      %p239 = scmp.lt.s32.totalorder %s238, 15
      %s240 = scalar_select %p239, %s238, 15
      %p241 = scmp.lt.s32.totalorder %s20, 0
      %s242 = scalar_select %p241, %s20, 0
      %s243 = sadd.s32 %s242, %s240
      %s244 = smul.addr %s243, 4
      %s245 = scalar_lea.vmem %s1, %s244
      %s246 = smul.u32 16, %s21
      %p247 = scmp.lt.s32.totalorder %s20, 0
      %s248 = scalar_select %p247, %s20, 0
      %s249 = scalar_lea.vmem %s2, %s248
      %s250 = smul.u32 64, %s19
      %p251 = scmp.lt.s32.totalorder %s250, 2047
      %s252 = scalar_select %p251, %s250, 2047
      %p253 = scmp.lt.s32.totalorder %s20, 0
      %s254 = scalar_select %p253, %s20, 0
      %s255 = sadd.s32 %s254, %s252
      %s256 = smul.addr %s255, 8
      %s257 = scalar_lea.vmem %s3, %s256
      %s258 = smul.u32 64, %s19
      %p259 = scmp.eq.s32.totalorder %s21, 0
      // Predicated region
      $region33: #{_conv2d_impl.1} parent=31 // pred_check
        %p260 = pneg %p259
      $region34: #{_conv2d_impl.1} parent=31 // pred_check_branch
        %262 = sbr.rel (%p260) target = $region36
      $region35: #{_conv2d_impl.1} parent=31 // pred_region
        %263 = vst [vmem:[#allocation2] sm:$0xff] 0.0
        %264 = vst [vmem:[#allocation2 + $0x8] sm:$0xff] 0.0
        %265 = vst [vmem:[#allocation2 + $0x10] sm:$0xff] 0.0
        %266 = vst [vmem:[#allocation2 + $0x18] sm:$0xff] 0.0
        %267 = vst [vmem:[#allocation2 + $0x20] sm:$0xff] 0.0
        %268 = vst [vmem:[#allocation2 + $0x28] sm:$0xff] 0.0
        %269 = vst [vmem:[#allocation2 + $0x30] sm:$0xff] 0.0
        %270 = vst [vmem:[#allocation2 + $0x38] sm:$0xff] 0.0
        %271 = vst [vmem:[#allocation2 + $0x40] sm:$0xff] 0.0
        %272 = vst [vmem:[#allocation2 + $0x48] sm:$0xff] 0.0
        %273 = vst [vmem:[#allocation2 + $0x50] sm:$0xff] 0.0
        %274 = vst [vmem:[#allocation2 + $0x58] sm:$0xff] 0.0
        %275 = vst [vmem:[#allocation2 + $0x60] sm:$0xff] 0.0
        %276 = vst [vmem:[#allocation2 + $0x68] sm:$0xff] 0.0
        %277 = vst [vmem:[#allocation2 + $0x70] sm:$0xff] 0.0
        %278 = vst [vmem:[#allocation2 + $0x78] sm:$0xff] 0.0
        %279 = vst [vmem:[#allocation2 + $0x80] sm:$0xff] 0.0
        %280 = vst [vmem:[#allocation2 + $0x88] sm:$0xff] 0.0
        %281 = vst [vmem:[#allocation2 + $0x90] sm:$0xff] 0.0
        %282 = vst [vmem:[#allocation2 + $0x98] sm:$0xff] 0.0
        %283 = vst [vmem:[#allocation2 + $0xa0] sm:$0xff] 0.0
        %284 = vst [vmem:[#allocation2 + $0xa8] sm:$0xff] 0.0
        %285 = vst [vmem:[#allocation2 + $0xb0] sm:$0xff] 0.0
        %286 = vst [vmem:[#allocation2 + $0xb8] sm:$0xff] 0.0
        %287 = vst [vmem:[#allocation2 + $0xc0] sm:$0xff] 0.0
        %288 = vst [vmem:[#allocation2 + $0xc8] sm:$0xff] 0.0
        %289 = vst [vmem:[#allocation2 + $0xd0] sm:$0xff] 0.0
        %290 = vst [vmem:[#allocation2 + $0xd8] sm:$0xff] 0.0
        %291 = vst [vmem:[#allocation2 + $0xe0] sm:$0xff] 0.0
        %292 = vst [vmem:[#allocation2 + $0xe8] sm:$0xff] 0.0
        %293 = vst [vmem:[#allocation2 + $0xf0] sm:$0xff] 0.0
        %294 = vst [vmem:[#allocation2 + $0xf8] sm:$0xff] 0.0
        %295 = vst [vmem:[#allocation2 + $0x100] sm:$0xff] 0.0
        %296 = vst [vmem:[#allocation2 + $0x108] sm:$0xff] 0.0
        %297 = vst [vmem:[#allocation2 + $0x110] sm:$0xff] 0.0
        %298 = vst [vmem:[#allocation2 + $0x118] sm:$0xff] 0.0
        %299 = vst [vmem:[#allocation2 + $0x120] sm:$0xff] 0.0
        %300 = vst [vmem:[#allocation2 + $0x128] sm:$0xff] 0.0
        %301 = vst [vmem:[#allocation2 + $0x130] sm:$0xff] 0.0
        %302 = vst [vmem:[#allocation2 + $0x138] sm:$0xff] 0.0
        %303 = vst [vmem:[#allocation2 + $0x140] sm:$0xff] 0.0
        %304 = vst [vmem:[#allocation2 + $0x148] sm:$0xff] 0.0
        %305 = vst [vmem:[#allocation2 + $0x150] sm:$0xff] 0.0
        %306 = vst [vmem:[#allocation2 + $0x158] sm:$0xff] 0.0
        %307 = vst [vmem:[#allocation2 + $0x160] sm:$0xff] 0.0
        %308 = vst [vmem:[#allocation2 + $0x168] sm:$0xff] 0.0
        %309 = vst [vmem:[#allocation2 + $0x170] sm:$0xff] 0.0
        %310 = vst [vmem:[#allocation2 + $0x178] sm:$0xff] 0.0
        %311 = vst [vmem:[#allocation2 + $0x180] sm:$0xff] 0.0
        %312 = vst [vmem:[#allocation2 + $0x188] sm:$0xff] 0.0
        %313 = vst [vmem:[#allocation2 + $0x190] sm:$0xff] 0.0
        %314 = vst [vmem:[#allocation2 + $0x198] sm:$0xff] 0.0
        %315 = vst [vmem:[#allocation2 + $0x1a0] sm:$0xff] 0.0
        %316 = vst [vmem:[#allocation2 + $0x1a8] sm:$0xff] 0.0
        %317 = vst [vmem:[#allocation2 + $0x1b0] sm:$0xff] 0.0
        %318 = vst [vmem:[#allocation2 + $0x1b8] sm:$0xff] 0.0
        %319 = vst [vmem:[#allocation2 + $0x1c0] sm:$0xff] 0.0
        %320 = vst [vmem:[#allocation2 + $0x1c8] sm:$0xff] 0.0
        %321 = vst [vmem:[#allocation2 + $0x1d0] sm:$0xff] 0.0
        %322 = vst [vmem:[#allocation2 + $0x1d8] sm:$0xff] 0.0
        %323 = vst [vmem:[#allocation2 + $0x1e0] sm:$0xff] 0.0
        %324 = vst [vmem:[#allocation2 + $0x1e8] sm:$0xff] 0.0
        %325 = vst [vmem:[#allocation2 + $0x1f0] sm:$0xff] 0.0
        %326 = vst [vmem:[#allocation2 + $0x1f8] sm:$0xff] 0.0
      $region36: #{_conv2d_impl.1} parent=31 // pred_fallthru
        _
      %v327 = vld [vmem:[#allocation2] sm:$0xff]
      %v328 = vld [vmem:[#allocation2 + $0x8] sm:$0xff]
      %v329 = vld [vmem:[#allocation2 + $0x10] sm:$0xff]
      %v330 = vld [vmem:[#allocation2 + $0x18] sm:$0xff]
      %v331 = vld [vmem:[#allocation2 + $0x20] sm:$0xff]
      %v332 = vld [vmem:[#allocation2 + $0x28] sm:$0xff]
      %v333 = vld [vmem:[#allocation2 + $0x30] sm:$0xff]
      %v334 = vld [vmem:[#allocation2 + $0x38] sm:$0xff]
      %v335 = vld [vmem:[#allocation2 + $0x40] sm:$0xff]
      %v336 = vld [vmem:[#allocation2 + $0x48] sm:$0xff]
      %v337 = vld [vmem:[#allocation2 + $0x50] sm:$0xff]
      %v338 = vld [vmem:[#allocation2 + $0x58] sm:$0xff]
      %v339 = vld [vmem:[#allocation2 + $0x60] sm:$0xff]
      %v340 = vld [vmem:[#allocation2 + $0x68] sm:$0xff]
      %v341 = vld [vmem:[#allocation2 + $0x70] sm:$0xff]
      %v342 = vld [vmem:[#allocation2 + $0x78] sm:$0xff]
      %v343 = vld [vmem:[#allocation2 + $0x80] sm:$0xff]
      %v344 = vld [vmem:[#allocation2 + $0x88] sm:$0xff]
      %v345 = vld [vmem:[#allocation2 + $0x90] sm:$0xff]
      %v346 = vld [vmem:[#allocation2 + $0x98] sm:$0xff]
      %v347 = vld [vmem:[#allocation2 + $0xa0] sm:$0xff]
      %v348 = vld [vmem:[#allocation2 + $0xa8] sm:$0xff]
      %v349 = vld [vmem:[#allocation2 + $0xb0] sm:$0xff]
      %v350 = vld [vmem:[#allocation2 + $0xb8] sm:$0xff]
      %v351 = vld [vmem:[#allocation2 + $0xc0] sm:$0xff]
      %v352 = vld [vmem:[#allocation2 + $0xc8] sm:$0xff]
      %v353 = vld [vmem:[#allocation2 + $0xd0] sm:$0xff]
      %v354 = vld [vmem:[#allocation2 + $0xd8] sm:$0xff]
      %v355 = vld [vmem:[#allocation2 + $0xe0] sm:$0xff]
      %v356 = vld [vmem:[#allocation2 + $0xe8] sm:$0xff]
      %v357 = vld [vmem:[#allocation2 + $0xf0] sm:$0xff]
      %v358 = vld [vmem:[#allocation2 + $0xf8] sm:$0xff]
      %v359 = vld [vmem:[#allocation2 + $0x100] sm:$0xff]
      %v360 = vld [vmem:[#allocation2 + $0x108] sm:$0xff]
      %v361 = vld [vmem:[#allocation2 + $0x110] sm:$0xff]
      %v362 = vld [vmem:[#allocation2 + $0x118] sm:$0xff]
      %v363 = vld [vmem:[#allocation2 + $0x120] sm:$0xff]
      %v364 = vld [vmem:[#allocation2 + $0x128] sm:$0xff]
      %v365 = vld [vmem:[#allocation2 + $0x130] sm:$0xff]
      %v366 = vld [vmem:[#allocation2 + $0x138] sm:$0xff]
      %v367 = vld [vmem:[#allocation2 + $0x140] sm:$0xff]
      %v368 = vld [vmem:[#allocation2 + $0x148] sm:$0xff]
      %v369 = vld [vmem:[#allocation2 + $0x150] sm:$0xff]
      %v370 = vld [vmem:[#allocation2 + $0x158] sm:$0xff]
      %v371 = vld [vmem:[#allocation2 + $0x160] sm:$0xff]
      %v372 = vld [vmem:[#allocation2 + $0x168] sm:$0xff]
      %v373 = vld [vmem:[#allocation2 + $0x170] sm:$0xff]
      %v374 = vld [vmem:[#allocation2 + $0x178] sm:$0xff]
      %v375 = vld [vmem:[#allocation2 + $0x180] sm:$0xff]
      %v376 = vld [vmem:[#allocation2 + $0x188] sm:$0xff]
      %v377 = vld [vmem:[#allocation2 + $0x190] sm:$0xff]
      %v378 = vld [vmem:[#allocation2 + $0x198] sm:$0xff]
      %v379 = vld [vmem:[#allocation2 + $0x1a0] sm:$0xff]
      %v380 = vld [vmem:[#allocation2 + $0x1a8] sm:$0xff]
      %v381 = vld [vmem:[#allocation2 + $0x1b0] sm:$0xff]
      %v382 = vld [vmem:[#allocation2 + $0x1b8] sm:$0xff]
      %v383 = vld [vmem:[#allocation2 + $0x1c0] sm:$0xff]
      %v384 = vld [vmem:[#allocation2 + $0x1c8] sm:$0xff]
      %v385 = vld [vmem:[#allocation2 + $0x1d0] sm:$0xff]
      %v386 = vld [vmem:[#allocation2 + $0x1d8] sm:$0xff]
      %v387 = vld [vmem:[#allocation2 + $0x1e0] sm:$0xff]
      %v388 = vld [vmem:[#allocation2 + $0x1e8] sm:$0xff]
      %v389 = vld [vmem:[#allocation2 + $0x1f0] sm:$0xff]
      %v390 = vld [vmem:[#allocation2 + $0x1f8] sm:$0xff]
      %v391 = vld [vmem:[%s236] sm:$0xf]
      %v392 = vld [vmem:[%s236 + $0x4] sm:$0xf]
      %v393 = vld [vmem:[%s236 + $0x8] sm:$0xf]
      %v394 = vld [vmem:[%s236 + $0xc] sm:$0xf]
      %v395 = vld [vmem:[%s236 + $0x10] sm:$0xf]
      %v396 = vld [vmem:[%s236 + $0x14] sm:$0xf]
      %v397 = vld [vmem:[%s236 + $0x18] sm:$0xf]
      %v398 = vld [vmem:[%s236 + $0x1c] sm:$0xf]
      %v399 = vld [vmem:[%s236 + $0x20] sm:$0xf]
      %v400 = vld [vmem:[%s236 + $0x24] sm:$0xf]
      %v401 = vld [vmem:[%s236 + $0x28] sm:$0xf]
      %v402 = vld [vmem:[%s236 + $0x2c] sm:$0xf]
      %v403 = vld [vmem:[%s236 + $0x30] sm:$0xf]
      %v404 = vld [vmem:[%s236 + $0x34] sm:$0xf]
      %v405 = vld [vmem:[%s236 + $0x38] sm:$0xf]
      %v406 = vld [vmem:[%s236 + $0x3c] sm:$0xf]
      %v407 = vld [vmem:[%s236 + $0x40] sm:$0xf]
      %v408 = vld [vmem:[%s236 + $0x44] sm:$0xf]
      %v409 = vld [vmem:[%s236 + $0x48] sm:$0xf]
      %v410 = vld [vmem:[%s236 + $0x4c] sm:$0xf]
      %v411 = vld [vmem:[%s236 + $0x50] sm:$0xf]
      %v412 = vld [vmem:[%s236 + $0x54] sm:$0xf]
      %v413 = vld [vmem:[%s236 + $0x58] sm:$0xf]
      %v414 = vld [vmem:[%s236 + $0x5c] sm:$0xf]
      %v415 = vld [vmem:[%s236 + $0x60] sm:$0xf]
      %v416 = vld [vmem:[%s236 + $0x64] sm:$0xf]
      %v417 = vld [vmem:[%s236 + $0x68] sm:$0xf]
      %v418 = vld [vmem:[%s236 + $0x6c] sm:$0xf]
      %v419 = vld [vmem:[%s236 + $0x70] sm:$0xf]
      %v420 = vld [vmem:[%s236 + $0x74] sm:$0xf]
      %v421 = vld [vmem:[%s236 + $0x78] sm:$0xf]
      %v422 = vld [vmem:[%s236 + $0x7c] sm:$0xf]
      %v423 = vld [vmem:[%s236 + $0x80] sm:$0xf]
      %v424 = vld [vmem:[%s236 + $0x84] sm:$0xf]
      %v425 = vld [vmem:[%s236 + $0x88] sm:$0xf]
      %v426 = vld [vmem:[%s236 + $0x8c] sm:$0xf]
      %v427 = vld [vmem:[%s236 + $0x90] sm:$0xf]
      %v428 = vld [vmem:[%s236 + $0x94] sm:$0xf]
      %v429 = vld [vmem:[%s236 + $0x98] sm:$0xf]
      %v430 = vld [vmem:[%s236 + $0x9c] sm:$0xf]
      %v431 = vld [vmem:[%s236 + $0xa0] sm:$0xf]
      %v432 = vld [vmem:[%s236 + $0xa4] sm:$0xf]
      %v433 = vld [vmem:[%s236 + $0xa8] sm:$0xf]
      %v434 = vld [vmem:[%s236 + $0xac] sm:$0xf]
      %v435 = vld [vmem:[%s236 + $0xb0] sm:$0xf]
      %v436 = vld [vmem:[%s236 + $0xb4] sm:$0xf]
      %v437 = vld [vmem:[%s236 + $0xb8] sm:$0xf]
      %v438 = vld [vmem:[%s236 + $0xbc] sm:$0xf]
      %v439 = vld [vmem:[%s236 + $0xc0] sm:$0xf]
      %v440 = vld [vmem:[%s236 + $0xc4] sm:$0xf]
      %v441 = vld [vmem:[%s236 + $0xc8] sm:$0xf]
      %v442 = vld [vmem:[%s236 + $0xcc] sm:$0xf]
      %v443 = vld [vmem:[%s236 + $0xd0] sm:$0xf]
      %v444 = vld [vmem:[%s236 + $0xd4] sm:$0xf]
      %v445 = vld [vmem:[%s236 + $0xd8] sm:$0xf]
      %v446 = vld [vmem:[%s236 + $0xdc] sm:$0xf]
      %v447 = vld [vmem:[%s236 + $0xe0] sm:$0xf]
      %v448 = vld [vmem:[%s236 + $0xe4] sm:$0xf]
      %v449 = vld [vmem:[%s236 + $0xe8] sm:$0xf]
      %v450 = vld [vmem:[%s236 + $0xec] sm:$0xf]
      %v451 = vld [vmem:[%s236 + $0xf0] sm:$0xf]
      %v452 = vld [vmem:[%s236 + $0xf4] sm:$0xf]
      %v453 = vld [vmem:[%s236 + $0xf8] sm:$0xf]
      %v454 = vld [vmem:[%s236 + $0xfc] sm:$0xf]
      %v455 = vld [vmem:[%s245] sm:$0xf]
      %v456 = vld [vmem:[%s245 + $0x4] sm:$0xf]
      %v457 = vld [vmem:[%s245 + $0x8] sm:$0xf]
      %v458 = vld [vmem:[%s245 + $0xc] sm:$0xf]
      %v459 = vld [vmem:[%s245 + $0x10] sm:$0xf]
      %v460 = vld [vmem:[%s245 + $0x14] sm:$0xf]
      %v461 = vld [vmem:[%s245 + $0x18] sm:$0xf]
      %v462 = vld [vmem:[%s245 + $0x1c] sm:$0xf]
      %v463 = vld [vmem:[%s245 + $0x20] sm:$0xf]
      %v464 = vld [vmem:[%s245 + $0x24] sm:$0xf]
      %v465 = vld [vmem:[%s245 + $0x28] sm:$0xf]
      %v466 = vld [vmem:[%s245 + $0x2c] sm:$0xf]
      %v467 = vld [vmem:[%s245 + $0x30] sm:$0xf]
      %v468 = vld [vmem:[%s245 + $0x34] sm:$0xf]
      %v469 = vld [vmem:[%s245 + $0x38] sm:$0xf]
      %v470 = vld [vmem:[%s245 + $0x3c] sm:$0xf]
      %v535 = vunpack.c.l.b16 %v391
      %v536 = vunpack.c.l.b16 %v392
      %v537 = vunpack.c.l.b16 %v393
      %v538 = vunpack.c.l.b16 %v394
      %v539 = vunpack.c.l.b16 %v395
      %v540 = vunpack.c.l.b16 %v396
      %v541 = vunpack.c.l.b16 %v397
      %v542 = vunpack.c.l.b16 %v398
      %v543 = vunpack.c.l.b16 %v399
      %v544 = vunpack.c.l.b16 %v400
      %v545 = vunpack.c.l.b16 %v401
      %v546 = vunpack.c.l.b16 %v402
      %v547 = vunpack.c.l.b16 %v403
      %v548 = vunpack.c.l.b16 %v404
      %v549 = vunpack.c.l.b16 %v405
      %v550 = vunpack.c.l.b16 %v406
      %v551 = vunpack.c.l.b16 %v407
      %v552 = vunpack.c.l.b16 %v408
      %v553 = vunpack.c.l.b16 %v409
      %v554 = vunpack.c.l.b16 %v410
      %v555 = vunpack.c.l.b16 %v411
      %v556 = vunpack.c.l.b16 %v412
      %v557 = vunpack.c.l.b16 %v413
      %v558 = vunpack.c.l.b16 %v414
      %v559 = vunpack.c.l.b16 %v415
      %v560 = vunpack.c.l.b16 %v416
      %v561 = vunpack.c.l.b16 %v417
      %v562 = vunpack.c.l.b16 %v418
      %v563 = vunpack.c.l.b16 %v419
      %v564 = vunpack.c.l.b16 %v420
      %v565 = vunpack.c.l.b16 %v421
      %v566 = vunpack.c.l.b16 %v422
      %v567 = vunpack.c.l.b16 %v423
      %v568 = vunpack.c.l.b16 %v424
      %v569 = vunpack.c.l.b16 %v425
      %v570 = vunpack.c.l.b16 %v426
      %v571 = vunpack.c.l.b16 %v427
      %v572 = vunpack.c.l.b16 %v428
      %v573 = vunpack.c.l.b16 %v429
      %v574 = vunpack.c.l.b16 %v430
      %v575 = vunpack.c.l.b16 %v431
      %v576 = vunpack.c.l.b16 %v432
      %v577 = vunpack.c.l.b16 %v433
      %v578 = vunpack.c.l.b16 %v434
      %v579 = vunpack.c.l.b16 %v435
      %v580 = vunpack.c.l.b16 %v436
      %v581 = vunpack.c.l.b16 %v437
      %v582 = vunpack.c.l.b16 %v438
      %v583 = vunpack.c.l.b16 %v439
      %v584 = vunpack.c.l.b16 %v440
      %v585 = vunpack.c.l.b16 %v441
      %v586 = vunpack.c.l.b16 %v442
      %v587 = vunpack.c.l.b16 %v443
      %v588 = vunpack.c.l.b16 %v444
      %v589 = vunpack.c.l.b16 %v445
      %v590 = vunpack.c.l.b16 %v446
      %v591 = vunpack.c.l.b16 %v447
      %v592 = vunpack.c.l.b16 %v448
      %v593 = vunpack.c.l.b16 %v449
      %v594 = vunpack.c.l.b16 %v450
      %v595 = vunpack.c.l.b16 %v451
      %v596 = vunpack.c.l.b16 %v452
      %v597 = vunpack.c.l.b16 %v453
      %v598 = vunpack.c.l.b16 %v454
      %v599 = vpack.c.b16 %v536, %v535
      %v600 = vpack.c.b16 %v538, %v537
      %v601 = vpack.c.b16 %v540, %v539
      %v602 = vpack.c.b16 %v542, %v541
      %v603 = vpack.c.b16 %v544, %v543
      %v604 = vpack.c.b16 %v546, %v545
      %v605 = vpack.c.b16 %v548, %v547
      %v606 = vpack.c.b16 %v550, %v549
      %v607 = vpack.c.b16 %v552, %v551
      %v608 = vpack.c.b16 %v554, %v553
      %v609 = vpack.c.b16 %v556, %v555
      %v610 = vpack.c.b16 %v558, %v557
      %v611 = vpack.c.b16 %v560, %v559
      %v612 = vpack.c.b16 %v562, %v561
      %v613 = vpack.c.b16 %v564, %v563
      %v614 = vpack.c.b16 %v566, %v565
      %v615 = vpack.c.b16 %v568, %v567
      %v616 = vpack.c.b16 %v570, %v569
      %v617 = vpack.c.b16 %v572, %v571
      %v618 = vpack.c.b16 %v574, %v573
      %v619 = vpack.c.b16 %v576, %v575
      %v620 = vpack.c.b16 %v578, %v577
      %v621 = vpack.c.b16 %v580, %v579
      %v622 = vpack.c.b16 %v582, %v581
      %v623 = vpack.c.b16 %v584, %v583
      %v624 = vpack.c.b16 %v586, %v585
      %v625 = vpack.c.b16 %v588, %v587
      %v626 = vpack.c.b16 %v590, %v589
      %v627 = vpack.c.b16 %v592, %v591
      %v628 = vpack.c.b16 %v594, %v593
      %v629 = vpack.c.b16 %v596, %v595
      %v630 = vpack.c.b16 %v598, %v597
      %v679 = vunpack.c.l.b16 %v455
      %v680 = vunpack.c.l.b16 %v456
      %v681 = vunpack.c.l.b16 %v457
      %v682 = vunpack.c.l.b16 %v458
      %v683 = vunpack.c.l.b16 %v459
      %v684 = vunpack.c.l.b16 %v460
      %v685 = vunpack.c.l.b16 %v461
      %v686 = vunpack.c.l.b16 %v462
      %v687 = vunpack.c.l.b16 %v463
      %v688 = vunpack.c.l.b16 %v464
      %v689 = vunpack.c.l.b16 %v465
      %v690 = vunpack.c.l.b16 %v466
      %v691 = vunpack.c.l.b16 %v467
      %v692 = vunpack.c.l.b16 %v468
      %v693 = vunpack.c.l.b16 %v469
      %v694 = vunpack.c.l.b16 %v470
      %v695 = vpack.c.b16 %v680, %v679
      %v696 = vpack.c.b16 %v682, %v681
      %v697 = vpack.c.b16 %v684, %v683
      %v698 = vpack.c.b16 %v686, %v685
      %v699 = vpack.c.b16 %v688, %v687
      %v700 = vpack.c.b16 %v690, %v689
      %v701 = vpack.c.b16 %v692, %v691
      %v702 = vpack.c.b16 %v694, %v693
      %711 = vmatpush.bf16.msra.mxu0 %v702
      %712 = vmatpush.bf16.msra.mxu0 %v701
      %713 = vmatpush.bf16.msra.mxu0 %v700
      %714 = vmatpush.bf16.msra.mxu0 %v699
      %715 = vmatpush.bf16.msra.mxu0 %v698
      %716 = vmatpush.bf16.msra.mxu0 %v697
      %717 = vmatpush.bf16.msra.mxu0 %v696
      %718 = vmatpush.bf16.msra.mxu0 %v695
      %719 = vmatmul.bf16.gmra.mxu0 %v599
      %v720 = vpop.f32.mrf.mxu0
      %v721 = vadd.f32 0.0, %v720
      %v722 = vpop.f32.mrf.mxu0
      %v723 = vadd.f32 0.0, %v722
      %724 = vmatmul.bf16.gmra.mxu0 %v600
      %v725 = vpop.f32.mrf.mxu0
      %v726 = vadd.f32 0.0, %v725
      %v727 = vpop.f32.mrf.mxu0
      %v728 = vadd.f32 0.0, %v727
      %729 = vmatmul.bf16.gmra.mxu0 %v601
      %v730 = vpop.f32.mrf.mxu0
      %v731 = vadd.f32 0.0, %v730
      %v732 = vpop.f32.mrf.mxu0
      %v733 = vadd.f32 0.0, %v732
      %734 = vmatmul.bf16.gmra.mxu0 %v602
      %v735 = vpop.f32.mrf.mxu0
      %v736 = vadd.f32 0.0, %v735
      %v737 = vpop.f32.mrf.mxu0
      %v738 = vadd.f32 0.0, %v737
      %739 = vmatmul.bf16.gmra.mxu0 %v603
      %v740 = vpop.f32.mrf.mxu0
      %v741 = vadd.f32 0.0, %v740
      %v742 = vpop.f32.mrf.mxu0
      %v743 = vadd.f32 0.0, %v742
      %744 = vmatmul.bf16.gmra.mxu0 %v604
      %v745 = vpop.f32.mrf.mxu0
      %v746 = vadd.f32 0.0, %v745
      %v747 = vpop.f32.mrf.mxu0
      %v748 = vadd.f32 0.0, %v747
      %749 = vmatmul.bf16.gmra.mxu0 %v605
      %v750 = vpop.f32.mrf.mxu0
      %v751 = vadd.f32 0.0, %v750
      %v752 = vpop.f32.mrf.mxu0
      %v753 = vadd.f32 0.0, %v752
      %754 = vmatmul.bf16.gmra.mxu0 %v606
      %v755 = vpop.f32.mrf.mxu0
      %v756 = vadd.f32 0.0, %v755
      %v757 = vpop.f32.mrf.mxu0
      %v758 = vadd.f32 0.0, %v757
      %759 = vmatmul.bf16.gmra.mxu0 %v607
      %v760 = vpop.f32.mrf.mxu0
      %v761 = vadd.f32 0.0, %v760
      %v762 = vpop.f32.mrf.mxu0
      %v763 = vadd.f32 0.0, %v762
      %764 = vmatmul.bf16.gmra.mxu0 %v608
      %v765 = vpop.f32.mrf.mxu0
      %v766 = vadd.f32 0.0, %v765
      %v767 = vpop.f32.mrf.mxu0
      %v768 = vadd.f32 0.0, %v767
      %769 = vmatmul.bf16.gmra.mxu0 %v609
      %v770 = vpop.f32.mrf.mxu0
      %v771 = vadd.f32 0.0, %v770
      %v772 = vpop.f32.mrf.mxu0
      %v773 = vadd.f32 0.0, %v772
      %774 = vmatmul.bf16.gmra.mxu0 %v610
      %v775 = vpop.f32.mrf.mxu0
      %v776 = vadd.f32 0.0, %v775
      %v777 = vpop.f32.mrf.mxu0
      %v778 = vadd.f32 0.0, %v777
      %779 = vmatmul.bf16.gmra.mxu0 %v611
      %v780 = vpop.f32.mrf.mxu0
      %v781 = vadd.f32 0.0, %v780
      %v782 = vpop.f32.mrf.mxu0
      %v783 = vadd.f32 0.0, %v782
      %784 = vmatmul.bf16.gmra.mxu0 %v612
      %v785 = vpop.f32.mrf.mxu0
      %v786 = vadd.f32 0.0, %v785
      %v787 = vpop.f32.mrf.mxu0
      %v788 = vadd.f32 0.0, %v787
      %789 = vmatmul.bf16.gmra.mxu0 %v613
      %v790 = vpop.f32.mrf.mxu0
      %v791 = vadd.f32 0.0, %v790
      %v792 = vpop.f32.mrf.mxu0
      %v793 = vadd.f32 0.0, %v792
      %794 = vmatmul.bf16.gmra.mxu0 %v614
      %v795 = vpop.f32.mrf.mxu0
      %v796 = vadd.f32 0.0, %v795
      %v797 = vpop.f32.mrf.mxu0
      %v798 = vadd.f32 0.0, %v797
      %799 = vmatmul.bf16.gmra.mxu0 %v615
      %v800 = vpop.f32.mrf.mxu0
      %v801 = vadd.f32 0.0, %v800
      %v802 = vpop.f32.mrf.mxu0
      %v803 = vadd.f32 0.0, %v802
      %804 = vmatmul.bf16.gmra.mxu0 %v616
      %v805 = vpop.f32.mrf.mxu0
      %v806 = vadd.f32 0.0, %v805
      %v807 = vpop.f32.mrf.mxu0
      %v808 = vadd.f32 0.0, %v807
      %809 = vmatmul.bf16.gmra.mxu0 %v617
      %v810 = vpop.f32.mrf.mxu0
      %v811 = vadd.f32 0.0, %v810
      %v812 = vpop.f32.mrf.mxu0
      %v813 = vadd.f32 0.0, %v812
      %814 = vmatmul.bf16.gmra.mxu0 %v618
      %v815 = vpop.f32.mrf.mxu0
      %v816 = vadd.f32 0.0, %v815
      %v817 = vpop.f32.mrf.mxu0
      %v818 = vadd.f32 0.0, %v817
      %819 = vmatmul.bf16.gmra.mxu0 %v619
      %v820 = vpop.f32.mrf.mxu0
      %v821 = vadd.f32 0.0, %v820
      %v822 = vpop.f32.mrf.mxu0
      %v823 = vadd.f32 0.0, %v822
      %824 = vmatmul.bf16.gmra.mxu0 %v620
      %v825 = vpop.f32.mrf.mxu0
      %v826 = vadd.f32 0.0, %v825
      %v827 = vpop.f32.mrf.mxu0
      %v828 = vadd.f32 0.0, %v827
      %829 = vmatmul.bf16.gmra.mxu0 %v621
      %v830 = vpop.f32.mrf.mxu0
      %v831 = vadd.f32 0.0, %v830
      %v832 = vpop.f32.mrf.mxu0
      %v833 = vadd.f32 0.0, %v832
      %834 = vmatmul.bf16.gmra.mxu0 %v622
      %v835 = vpop.f32.mrf.mxu0
      %v836 = vadd.f32 0.0, %v835
      %v837 = vpop.f32.mrf.mxu0
      %v838 = vadd.f32 0.0, %v837
      %839 = vmatmul.bf16.gmra.mxu0 %v623
      %v840 = vpop.f32.mrf.mxu0
      %v841 = vadd.f32 0.0, %v840
      %v842 = vpop.f32.mrf.mxu0
      %v843 = vadd.f32 0.0, %v842
      %844 = vmatmul.bf16.gmra.mxu0 %v624
      %v845 = vpop.f32.mrf.mxu0
      %v846 = vadd.f32 0.0, %v845
      %v847 = vpop.f32.mrf.mxu0
      %v848 = vadd.f32 0.0, %v847
      %849 = vmatmul.bf16.gmra.mxu0 %v625
      %v850 = vpop.f32.mrf.mxu0
      %v851 = vadd.f32 0.0, %v850
      %v852 = vpop.f32.mrf.mxu0
      %v853 = vadd.f32 0.0, %v852
      %854 = vmatmul.bf16.gmra.mxu0 %v626
      %v855 = vpop.f32.mrf.mxu0
      %v856 = vadd.f32 0.0, %v855
      %v857 = vpop.f32.mrf.mxu0
      %v858 = vadd.f32 0.0, %v857
      %859 = vmatmul.bf16.gmra.mxu0 %v627
      %v860 = vpop.f32.mrf.mxu0
      %v861 = vadd.f32 0.0, %v860
      %v862 = vpop.f32.mrf.mxu0
      %v863 = vadd.f32 0.0, %v862
      %864 = vmatmul.bf16.gmra.mxu0 %v628
      %v865 = vpop.f32.mrf.mxu0
      %v866 = vadd.f32 0.0, %v865
      %v867 = vpop.f32.mrf.mxu0
      %v868 = vadd.f32 0.0, %v867
      %869 = vmatmul.bf16.gmra.mxu0 %v629
      %v870 = vpop.f32.mrf.mxu0
      %v871 = vadd.f32 0.0, %v870
      %v872 = vpop.f32.mrf.mxu0
      %v873 = vadd.f32 0.0, %v872
      %874 = vmatmul.bf16.gmra.mxu0 %v630
      %v875 = vpop.f32.mrf.mxu0
      %v876 = vadd.f32 0.0, %v875
      %v877 = vpop.f32.mrf.mxu0
      %v878 = vadd.f32 0.0, %v877
      %879 = vdwg.mxu0
      %v880 = vadd.f32 %v327, %v721
      %v881 = vadd.f32 %v328, %v723
      %v882 = vadd.f32 %v329, %v726
      %v883 = vadd.f32 %v330, %v728
      %v884 = vadd.f32 %v331, %v731
      %v885 = vadd.f32 %v332, %v733
      %v886 = vadd.f32 %v333, %v736
      %v887 = vadd.f32 %v334, %v738
      %v888 = vadd.f32 %v335, %v741
      %v889 = vadd.f32 %v336, %v743
      %v890 = vadd.f32 %v337, %v746
      %v891 = vadd.f32 %v338, %v748
      %v892 = vadd.f32 %v339, %v751
      %v893 = vadd.f32 %v340, %v753
      %v894 = vadd.f32 %v341, %v756
      %v895 = vadd.f32 %v342, %v758
      %v896 = vadd.f32 %v343, %v761
      %v897 = vadd.f32 %v344, %v763
      %v898 = vadd.f32 %v345, %v766
      %v899 = vadd.f32 %v346, %v768
      %v900 = vadd.f32 %v347, %v771
      %v901 = vadd.f32 %v348, %v773
      %v902 = vadd.f32 %v349, %v776
      %v903 = vadd.f32 %v350, %v778
      %v904 = vadd.f32 %v351, %v781
      %v905 = vadd.f32 %v352, %v783
      %v906 = vadd.f32 %v353, %v786
      %v907 = vadd.f32 %v354, %v788
      %v908 = vadd.f32 %v355, %v791
      %v909 = vadd.f32 %v356, %v793
      %v910 = vadd.f32 %v357, %v796
      %v911 = vadd.f32 %v358, %v798
      %v912 = vadd.f32 %v359, %v801
      %v913 = vadd.f32 %v360, %v803
      %v914 = vadd.f32 %v361, %v806
      %v915 = vadd.f32 %v362, %v808
      %v916 = vadd.f32 %v363, %v811
      %v917 = vadd.f32 %v364, %v813
      %v918 = vadd.f32 %v365, %v816
      %v919 = vadd.f32 %v366, %v818
      %v920 = vadd.f32 %v367, %v821
      %v921 = vadd.f32 %v368, %v823
      %v922 = vadd.f32 %v369, %v826
      %v923 = vadd.f32 %v370, %v828
      %v924 = vadd.f32 %v371, %v831
      %v925 = vadd.f32 %v372, %v833
      %v926 = vadd.f32 %v373, %v836
      %v927 = vadd.f32 %v374, %v838
      %v928 = vadd.f32 %v375, %v841
      %v929 = vadd.f32 %v376, %v843
      %v930 = vadd.f32 %v377, %v846
      %v931 = vadd.f32 %v378, %v848
      %v932 = vadd.f32 %v379, %v851
      %v933 = vadd.f32 %v380, %v853
      %v934 = vadd.f32 %v381, %v856
      %v935 = vadd.f32 %v382, %v858
      %v936 = vadd.f32 %v383, %v861
      %v937 = vadd.f32 %v384, %v863
      %v938 = vadd.f32 %v385, %v866
      %v939 = vadd.f32 %v386, %v868
      %v940 = vadd.f32 %v387, %v871
      %v941 = vadd.f32 %v388, %v873
      %v942 = vadd.f32 %v389, %v876
      %v943 = vadd.f32 %v390, %v878
      %944 = vst [vmem:[#allocation2] sm:$0xff] %v880
      %945 = vst [vmem:[#allocation2 + $0x8] sm:$0xff] %v881
      %946 = vst [vmem:[#allocation2 + $0x10] sm:$0xff] %v882
      %947 = vst [vmem:[#allocation2 + $0x18] sm:$0xff] %v883
      %948 = vst [vmem:[#allocation2 + $0x20] sm:$0xff] %v884
      %949 = vst [vmem:[#allocation2 + $0x28] sm:$0xff] %v885
      %950 = vst [vmem:[#allocation2 + $0x30] sm:$0xff] %v886
      %951 = vst [vmem:[#allocation2 + $0x38] sm:$0xff] %v887
      %952 = vst [vmem:[#allocation2 + $0x40] sm:$0xff] %v888
      %953 = vst [vmem:[#allocation2 + $0x48] sm:$0xff] %v889
      %954 = vst [vmem:[#allocation2 + $0x50] sm:$0xff] %v890
      %955 = vst [vmem:[#allocation2 + $0x58] sm:$0xff] %v891
      %956 = vst [vmem:[#allocation2 + $0x60] sm:$0xff] %v892
      %957 = vst [vmem:[#allocation2 + $0x68] sm:$0xff] %v893
      %958 = vst [vmem:[#allocation2 + $0x70] sm:$0xff] %v894
      %959 = vst [vmem:[#allocation2 + $0x78] sm:$0xff] %v895
      %960 = vst [vmem:[#allocation2 + $0x80] sm:$0xff] %v896
      %961 = vst [vmem:[#allocation2 + $0x88] sm:$0xff] %v897
      %962 = vst [vmem:[#allocation2 + $0x90] sm:$0xff] %v898
      %963 = vst [vmem:[#allocation2 + $0x98] sm:$0xff] %v899
      %964 = vst [vmem:[#allocation2 + $0xa0] sm:$0xff] %v900
      %965 = vst [vmem:[#allocation2 + $0xa8] sm:$0xff] %v901
      %966 = vst [vmem:[#allocation2 + $0xb0] sm:$0xff] %v902
      %967 = vst [vmem:[#allocation2 + $0xb8] sm:$0xff] %v903
      %968 = vst [vmem:[#allocation2 + $0xc0] sm:$0xff] %v904
      %969 = vst [vmem:[#allocation2 + $0xc8] sm:$0xff] %v905
      %970 = vst [vmem:[#allocation2 + $0xd0] sm:$0xff] %v906
      %971 = vst [vmem:[#allocation2 + $0xd8] sm:$0xff] %v907
      %972 = vst [vmem:[#allocation2 + $0xe0] sm:$0xff] %v908
      %973 = vst [vmem:[#allocation2 + $0xe8] sm:$0xff] %v909
      %974 = vst [vmem:[#allocation2 + $0xf0] sm:$0xff] %v910
      %975 = vst [vmem:[#allocation2 + $0xf8] sm:$0xff] %v911
      %976 = vst [vmem:[#allocation2 + $0x100] sm:$0xff] %v912
      %977 = vst [vmem:[#allocation2 + $0x108] sm:$0xff] %v913
      %978 = vst [vmem:[#allocation2 + $0x110] sm:$0xff] %v914
      %979 = vst [vmem:[#allocation2 + $0x118] sm:$0xff] %v915
      %980 = vst [vmem:[#allocation2 + $0x120] sm:$0xff] %v916
      %981 = vst [vmem:[#allocation2 + $0x128] sm:$0xff] %v917
      %982 = vst [vmem:[#allocation2 + $0x130] sm:$0xff] %v918
      %983 = vst [vmem:[#allocation2 + $0x138] sm:$0xff] %v919
      %984 = vst [vmem:[#allocation2 + $0x140] sm:$0xff] %v920
      %985 = vst [vmem:[#allocation2 + $0x148] sm:$0xff] %v921
      %986 = vst [vmem:[#allocation2 + $0x150] sm:$0xff] %v922
      %987 = vst [vmem:[#allocation2 + $0x158] sm:$0xff] %v923
      %988 = vst [vmem:[#allocation2 + $0x160] sm:$0xff] %v924
      %989 = vst [vmem:[#allocation2 + $0x168] sm:$0xff] %v925
      %990 = vst [vmem:[#allocation2 + $0x170] sm:$0xff] %v926
      %991 = vst [vmem:[#allocation2 + $0x178] sm:$0xff] %v927
      %992 = vst [vmem:[#allocation2 + $0x180] sm:$0xff] %v928
      %993 = vst [vmem:[#allocation2 + $0x188] sm:$0xff] %v929
      %994 = vst [vmem:[#allocation2 + $0x190] sm:$0xff] %v930
      %995 = vst [vmem:[#allocation2 + $0x198] sm:$0xff] %v931
      %996 = vst [vmem:[#allocation2 + $0x1a0] sm:$0xff] %v932
      %997 = vst [vmem:[#allocation2 + $0x1a8] sm:$0xff] %v933
      %998 = vst [vmem:[#allocation2 + $0x1b0] sm:$0xff] %v934
      %999 = vst [vmem:[#allocation2 + $0x1b8] sm:$0xff] %v935
      %1000 = vst [vmem:[#allocation2 + $0x1c0] sm:$0xff] %v936
      %1001 = vst [vmem:[#allocation2 + $0x1c8] sm:$0xff] %v937
      %1002 = vst [vmem:[#allocation2 + $0x1d0] sm:$0xff] %v938
      %1003 = vst [vmem:[#allocation2 + $0x1d8] sm:$0xff] %v939
      %1004 = vst [vmem:[#allocation2 + $0x1e0] sm:$0xff] %v940
      %1005 = vst [vmem:[#allocation2 + $0x1e8] sm:$0xff] %v941
      %1006 = vst [vmem:[#allocation2 + $0x1f0] sm:$0xff] %v942
      %1007 = vst [vmem:[#allocation2 + $0x1f8] sm:$0xff] %v943
      // Predicated region
      $region37: #{_conv2d_impl.1} parent=31 // pred_check
        %p1008 = pneg %p259
      $region38: #{_conv2d_impl.1} parent=31 // pred_check_branch
        %1010 = sbr.rel (%p1008) target = $region40
      $region39: #{_conv2d_impl.1} parent=31 // pred_region
        %v1011 = vld [vmem:[#allocation2] sm:$0xff]
        %v1012 = vld [vmem:[#allocation2 + $0x8] sm:$0xff]
        %v1013 = vld [vmem:[#allocation2 + $0x10] sm:$0xff]
        %v1014 = vld [vmem:[#allocation2 + $0x18] sm:$0xff]
        %v1015 = vld [vmem:[#allocation2 + $0x20] sm:$0xff]
        %v1016 = vld [vmem:[#allocation2 + $0x28] sm:$0xff]
        %v1017 = vld [vmem:[#allocation2 + $0x30] sm:$0xff]
        %v1018 = vld [vmem:[#allocation2 + $0x38] sm:$0xff]
        %v1019 = vld [vmem:[#allocation2 + $0x40] sm:$0xff]
        %v1020 = vld [vmem:[#allocation2 + $0x48] sm:$0xff]
        %v1021 = vld [vmem:[#allocation2 + $0x50] sm:$0xff]
        %v1022 = vld [vmem:[#allocation2 + $0x58] sm:$0xff]
        %v1023 = vld [vmem:[#allocation2 + $0x60] sm:$0xff]
        %v1024 = vld [vmem:[#allocation2 + $0x68] sm:$0xff]
        %v1025 = vld [vmem:[#allocation2 + $0x70] sm:$0xff]
        %v1026 = vld [vmem:[#allocation2 + $0x78] sm:$0xff]
        %v1027 = vld [vmem:[#allocation2 + $0x80] sm:$0xff]
        %v1028 = vld [vmem:[#allocation2 + $0x88] sm:$0xff]
        %v1029 = vld [vmem:[#allocation2 + $0x90] sm:$0xff]
        %v1030 = vld [vmem:[#allocation2 + $0x98] sm:$0xff]
        %v1031 = vld [vmem:[#allocation2 + $0xa0] sm:$0xff]
        %v1032 = vld [vmem:[#allocation2 + $0xa8] sm:$0xff]
        %v1033 = vld [vmem:[#allocation2 + $0xb0] sm:$0xff]
        %v1034 = vld [vmem:[#allocation2 + $0xb8] sm:$0xff]
        %v1035 = vld [vmem:[#allocation2 + $0xc0] sm:$0xff]
        %v1036 = vld [vmem:[#allocation2 + $0xc8] sm:$0xff]
        %v1037 = vld [vmem:[#allocation2 + $0xd0] sm:$0xff]
        %v1038 = vld [vmem:[#allocation2 + $0xd8] sm:$0xff]
        %v1039 = vld [vmem:[#allocation2 + $0xe0] sm:$0xff]
        %v1040 = vld [vmem:[#allocation2 + $0xe8] sm:$0xff]
        %v1041 = vld [vmem:[#allocation2 + $0xf0] sm:$0xff]
        %v1042 = vld [vmem:[#allocation2 + $0xf8] sm:$0xff]
        %v1043 = vld [vmem:[#allocation2 + $0x100] sm:$0xff]
        %v1044 = vld [vmem:[#allocation2 + $0x108] sm:$0xff]
        %v1045 = vld [vmem:[#allocation2 + $0x110] sm:$0xff]
        %v1046 = vld [vmem:[#allocation2 + $0x118] sm:$0xff]
        %v1047 = vld [vmem:[#allocation2 + $0x120] sm:$0xff]
        %v1048 = vld [vmem:[#allocation2 + $0x128] sm:$0xff]
        %v1049 = vld [vmem:[#allocation2 + $0x130] sm:$0xff]
        %v1050 = vld [vmem:[#allocation2 + $0x138] sm:$0xff]
        %v1051 = vld [vmem:[#allocation2 + $0x140] sm:$0xff]
        %v1052 = vld [vmem:[#allocation2 + $0x148] sm:$0xff]
        %v1053 = vld [vmem:[#allocation2 + $0x150] sm:$0xff]
        %v1054 = vld [vmem:[#allocation2 + $0x158] sm:$0xff]
        %v1055 = vld [vmem:[#allocation2 + $0x160] sm:$0xff]
        %v1056 = vld [vmem:[#allocation2 + $0x168] sm:$0xff]
        %v1057 = vld [vmem:[#allocation2 + $0x170] sm:$0xff]
        %v1058 = vld [vmem:[#allocation2 + $0x178] sm:$0xff]
        %v1059 = vld [vmem:[#allocation2 + $0x180] sm:$0xff]
        %v1060 = vld [vmem:[#allocation2 + $0x188] sm:$0xff]
        %v1061 = vld [vmem:[#allocation2 + $0x190] sm:$0xff]
        %v1062 = vld [vmem:[#allocation2 + $0x198] sm:$0xff]
        %v1063 = vld [vmem:[#allocation2 + $0x1a0] sm:$0xff]
        %v1064 = vld [vmem:[#allocation2 + $0x1a8] sm:$0xff]
        %v1065 = vld [vmem:[#allocation2 + $0x1b0] sm:$0xff]
        %v1066 = vld [vmem:[#allocation2 + $0x1b8] sm:$0xff]
        %v1067 = vld [vmem:[#allocation2 + $0x1c0] sm:$0xff]
        %v1068 = vld [vmem:[#allocation2 + $0x1c8] sm:$0xff]
        %v1069 = vld [vmem:[#allocation2 + $0x1d0] sm:$0xff]
        %v1070 = vld [vmem:[#allocation2 + $0x1d8] sm:$0xff]
        %v1071 = vld [vmem:[#allocation2 + $0x1e0] sm:$0xff]
        %v1072 = vld [vmem:[#allocation2 + $0x1e8] sm:$0xff]
        %v1073 = vld [vmem:[#allocation2 + $0x1f0] sm:$0xff]
        %v1074 = vld [vmem:[#allocation2 + $0x1f8] sm:$0xff]
        %v1075 = vld [vmem:[%s249] sm:$0x1]
        %v1077 = vperm.slane %v1075, 0
        %v1079 = vadd.f32 %v1011, %v1077
        %v1080 = vadd.f32 %v1012, %v1077
        %v1081 = vadd.f32 %v1013, %v1077
        %v1082 = vadd.f32 %v1014, %v1077
        %v1083 = vadd.f32 %v1015, %v1077
        %v1084 = vadd.f32 %v1016, %v1077
        %v1085 = vadd.f32 %v1017, %v1077
        %v1086 = vadd.f32 %v1018, %v1077
        %v1087 = vadd.f32 %v1019, %v1077
        %v1088 = vadd.f32 %v1020, %v1077
        %v1089 = vadd.f32 %v1021, %v1077
        %v1090 = vadd.f32 %v1022, %v1077
        %v1091 = vadd.f32 %v1023, %v1077
        %v1092 = vadd.f32 %v1024, %v1077
        %v1093 = vadd.f32 %v1025, %v1077
        %v1094 = vadd.f32 %v1026, %v1077
        %v1095 = vadd.f32 %v1027, %v1077
        %v1096 = vadd.f32 %v1028, %v1077
        %v1097 = vadd.f32 %v1029, %v1077
        %v1098 = vadd.f32 %v1030, %v1077
        %v1099 = vadd.f32 %v1031, %v1077
        %v1100 = vadd.f32 %v1032, %v1077
        %v1101 = vadd.f32 %v1033, %v1077
        %v1102 = vadd.f32 %v1034, %v1077
        %v1103 = vadd.f32 %v1035, %v1077
        %v1104 = vadd.f32 %v1036, %v1077
        %v1105 = vadd.f32 %v1037, %v1077
        %v1106 = vadd.f32 %v1038, %v1077
        %v1107 = vadd.f32 %v1039, %v1077
        %v1108 = vadd.f32 %v1040, %v1077
        %v1109 = vadd.f32 %v1041, %v1077
        %v1110 = vadd.f32 %v1042, %v1077
        %v1111 = vadd.f32 %v1043, %v1077
        %v1112 = vadd.f32 %v1044, %v1077
        %v1113 = vadd.f32 %v1045, %v1077
        %v1114 = vadd.f32 %v1046, %v1077
        %v1115 = vadd.f32 %v1047, %v1077
        %v1116 = vadd.f32 %v1048, %v1077
        %v1117 = vadd.f32 %v1049, %v1077
        %v1118 = vadd.f32 %v1050, %v1077
        %v1119 = vadd.f32 %v1051, %v1077
        %v1120 = vadd.f32 %v1052, %v1077
        %v1121 = vadd.f32 %v1053, %v1077
        %v1122 = vadd.f32 %v1054, %v1077
        %v1123 = vadd.f32 %v1055, %v1077
        %v1124 = vadd.f32 %v1056, %v1077
        %v1125 = vadd.f32 %v1057, %v1077
        %v1126 = vadd.f32 %v1058, %v1077
        %v1127 = vadd.f32 %v1059, %v1077
        %v1128 = vadd.f32 %v1060, %v1077
        %v1129 = vadd.f32 %v1061, %v1077
        %v1130 = vadd.f32 %v1062, %v1077
        %v1131 = vadd.f32 %v1063, %v1077
        %v1132 = vadd.f32 %v1064, %v1077
        %v1133 = vadd.f32 %v1065, %v1077
        %v1134 = vadd.f32 %v1066, %v1077
        %v1135 = vadd.f32 %v1067, %v1077
        %v1136 = vadd.f32 %v1068, %v1077
        %v1137 = vadd.f32 %v1069, %v1077
        %v1138 = vadd.f32 %v1070, %v1077
        %v1139 = vadd.f32 %v1071, %v1077
        %v1140 = vadd.f32 %v1072, %v1077
        %v1141 = vadd.f32 %v1073, %v1077
        %v1142 = vadd.f32 %v1074, %v1077
        %vm1143 = vcmp.ge.f32.partialorder %v1079, 0.0
        %vm1144 = vcmp.ge.f32.partialorder %v1080, 0.0
        %vm1145 = vcmp.ge.f32.partialorder %v1081, 0.0
        %vm1146 = vcmp.ge.f32.partialorder %v1082, 0.0
        %vm1147 = vcmp.ge.f32.partialorder %v1083, 0.0
        %vm1148 = vcmp.ge.f32.partialorder %v1084, 0.0
        %vm1149 = vcmp.ge.f32.partialorder %v1085, 0.0
        %vm1150 = vcmp.ge.f32.partialorder %v1086, 0.0
        %vm1151 = vcmp.ge.f32.partialorder %v1087, 0.0
        %vm1152 = vcmp.ge.f32.partialorder %v1088, 0.0
        %vm1153 = vcmp.ge.f32.partialorder %v1089, 0.0
        %vm1154 = vcmp.ge.f32.partialorder %v1090, 0.0
        %vm1155 = vcmp.ge.f32.partialorder %v1091, 0.0
        %vm1156 = vcmp.ge.f32.partialorder %v1092, 0.0
        %vm1157 = vcmp.ge.f32.partialorder %v1093, 0.0
        %vm1158 = vcmp.ge.f32.partialorder %v1094, 0.0
        %vm1159 = vcmp.ge.f32.partialorder %v1095, 0.0
        %vm1160 = vcmp.ge.f32.partialorder %v1096, 0.0
        %vm1161 = vcmp.ge.f32.partialorder %v1097, 0.0
        %vm1162 = vcmp.ge.f32.partialorder %v1098, 0.0
        %vm1163 = vcmp.ge.f32.partialorder %v1099, 0.0
        %vm1164 = vcmp.ge.f32.partialorder %v1100, 0.0
        %vm1165 = vcmp.ge.f32.partialorder %v1101, 0.0
        %vm1166 = vcmp.ge.f32.partialorder %v1102, 0.0
        %vm1167 = vcmp.ge.f32.partialorder %v1103, 0.0
        %vm1168 = vcmp.ge.f32.partialorder %v1104, 0.0
        %vm1169 = vcmp.ge.f32.partialorder %v1105, 0.0
        %vm1170 = vcmp.ge.f32.partialorder %v1106, 0.0
        %vm1171 = vcmp.ge.f32.partialorder %v1107, 0.0
        %vm1172 = vcmp.ge.f32.partialorder %v1108, 0.0
        %vm1173 = vcmp.ge.f32.partialorder %v1109, 0.0
        %vm1174 = vcmp.ge.f32.partialorder %v1110, 0.0
        %vm1175 = vcmp.ge.f32.partialorder %v1111, 0.0
        %vm1176 = vcmp.ge.f32.partialorder %v1112, 0.0
        %vm1177 = vcmp.ge.f32.partialorder %v1113, 0.0
        %vm1178 = vcmp.ge.f32.partialorder %v1114, 0.0
        %vm1179 = vcmp.ge.f32.partialorder %v1115, 0.0
        %vm1180 = vcmp.ge.f32.partialorder %v1116, 0.0
        %vm1181 = vcmp.ge.f32.partialorder %v1117, 0.0
        %vm1182 = vcmp.ge.f32.partialorder %v1118, 0.0
        %vm1183 = vcmp.ge.f32.partialorder %v1119, 0.0
        %vm1184 = vcmp.ge.f32.partialorder %v1120, 0.0
        %vm1185 = vcmp.ge.f32.partialorder %v1121, 0.0
        %vm1186 = vcmp.ge.f32.partialorder %v1122, 0.0
        %vm1187 = vcmp.ge.f32.partialorder %v1123, 0.0
        %vm1188 = vcmp.ge.f32.partialorder %v1124, 0.0
        %vm1189 = vcmp.ge.f32.partialorder %v1125, 0.0
        %vm1190 = vcmp.ge.f32.partialorder %v1126, 0.0
        %vm1191 = vcmp.ge.f32.partialorder %v1127, 0.0
        %vm1192 = vcmp.ge.f32.partialorder %v1128, 0.0
        %vm1193 = vcmp.ge.f32.partialorder %v1129, 0.0
        %vm1194 = vcmp.ge.f32.partialorder %v1130, 0.0
        %vm1195 = vcmp.ge.f32.partialorder %v1131, 0.0
        %vm1196 = vcmp.ge.f32.partialorder %v1132, 0.0
        %vm1197 = vcmp.ge.f32.partialorder %v1133, 0.0
        %vm1198 = vcmp.ge.f32.partialorder %v1134, 0.0
        %vm1199 = vcmp.ge.f32.partialorder %v1135, 0.0
        %vm1200 = vcmp.ge.f32.partialorder %v1136, 0.0
        %vm1201 = vcmp.ge.f32.partialorder %v1137, 0.0
        %vm1202 = vcmp.ge.f32.partialorder %v1138, 0.0
        %vm1203 = vcmp.ge.f32.partialorder %v1139, 0.0
        %vm1204 = vcmp.ge.f32.partialorder %v1140, 0.0
        %vm1205 = vcmp.ge.f32.partialorder %v1141, 0.0
        %vm1206 = vcmp.ge.f32.partialorder %v1142, 0.0
        %v1207 = vmul.f32 %v1079, 0.2
        %v1208 = vmul.f32 %v1080, 0.2
        %v1209 = vmul.f32 %v1081, 0.2
        %v1210 = vmul.f32 %v1082, 0.2
        %v1211 = vmul.f32 %v1083, 0.2
        %v1212 = vmul.f32 %v1084, 0.2
        %v1213 = vmul.f32 %v1085, 0.2
        %v1214 = vmul.f32 %v1086, 0.2
        %v1215 = vmul.f32 %v1087, 0.2
        %v1216 = vmul.f32 %v1088, 0.2
        %v1217 = vmul.f32 %v1089, 0.2
        %v1218 = vmul.f32 %v1090, 0.2
        %v1219 = vmul.f32 %v1091, 0.2
        %v1220 = vmul.f32 %v1092, 0.2
        %v1221 = vmul.f32 %v1093, 0.2
        %v1222 = vmul.f32 %v1094, 0.2
        %v1223 = vmul.f32 %v1095, 0.2
        %v1224 = vmul.f32 %v1096, 0.2
        %v1225 = vmul.f32 %v1097, 0.2
        %v1226 = vmul.f32 %v1098, 0.2
        %v1227 = vmul.f32 %v1099, 0.2
        %v1228 = vmul.f32 %v1100, 0.2
        %v1229 = vmul.f32 %v1101, 0.2
        %v1230 = vmul.f32 %v1102, 0.2
        %v1231 = vmul.f32 %v1103, 0.2
        %v1232 = vmul.f32 %v1104, 0.2
        %v1233 = vmul.f32 %v1105, 0.2
        %v1234 = vmul.f32 %v1106, 0.2
        %v1235 = vmul.f32 %v1107, 0.2
        %v1236 = vmul.f32 %v1108, 0.2
        %v1237 = vmul.f32 %v1109, 0.2
        %v1238 = vmul.f32 %v1110, 0.2
        %v1239 = vmul.f32 %v1111, 0.2
        %v1240 = vmul.f32 %v1112, 0.2
        %v1241 = vmul.f32 %v1113, 0.2
        %v1242 = vmul.f32 %v1114, 0.2
        %v1243 = vmul.f32 %v1115, 0.2
        %v1244 = vmul.f32 %v1116, 0.2
        %v1245 = vmul.f32 %v1117, 0.2
        %v1246 = vmul.f32 %v1118, 0.2
        %v1247 = vmul.f32 %v1119, 0.2
        %v1248 = vmul.f32 %v1120, 0.2
        %v1249 = vmul.f32 %v1121, 0.2
        %v1250 = vmul.f32 %v1122, 0.2
        %v1251 = vmul.f32 %v1123, 0.2
        %v1252 = vmul.f32 %v1124, 0.2
        %v1253 = vmul.f32 %v1125, 0.2
        %v1254 = vmul.f32 %v1126, 0.2
        %v1255 = vmul.f32 %v1127, 0.2
        %v1256 = vmul.f32 %v1128, 0.2
        %v1257 = vmul.f32 %v1129, 0.2
        %v1258 = vmul.f32 %v1130, 0.2
        %v1259 = vmul.f32 %v1131, 0.2
        %v1260 = vmul.f32 %v1132, 0.2
        %v1261 = vmul.f32 %v1133, 0.2
        %v1262 = vmul.f32 %v1134, 0.2
        %v1263 = vmul.f32 %v1135, 0.2
        %v1264 = vmul.f32 %v1136, 0.2
        %v1265 = vmul.f32 %v1137, 0.2
        %v1266 = vmul.f32 %v1138, 0.2
        %v1267 = vmul.f32 %v1139, 0.2
        %v1268 = vmul.f32 %v1140, 0.2
        %v1269 = vmul.f32 %v1141, 0.2
        %v1270 = vmul.f32 %v1142, 0.2
        %v1271 = vsel %vm1143, %v1079, %v1207
        %v1272 = vsel %vm1144, %v1080, %v1208
        %v1273 = vsel %vm1145, %v1081, %v1209
        %v1274 = vsel %vm1146, %v1082, %v1210
        %v1275 = vsel %vm1147, %v1083, %v1211
        %v1276 = vsel %vm1148, %v1084, %v1212
        %v1277 = vsel %vm1149, %v1085, %v1213
        %v1278 = vsel %vm1150, %v1086, %v1214
        %v1279 = vsel %vm1151, %v1087, %v1215
        %v1280 = vsel %vm1152, %v1088, %v1216
        %v1281 = vsel %vm1153, %v1089, %v1217
        %v1282 = vsel %vm1154, %v1090, %v1218
        %v1283 = vsel %vm1155, %v1091, %v1219
        %v1284 = vsel %vm1156, %v1092, %v1220
        %v1285 = vsel %vm1157, %v1093, %v1221
        %v1286 = vsel %vm1158, %v1094, %v1222
        %v1287 = vsel %vm1159, %v1095, %v1223
        %v1288 = vsel %vm1160, %v1096, %v1224
        %v1289 = vsel %vm1161, %v1097, %v1225
        %v1290 = vsel %vm1162, %v1098, %v1226
        %v1291 = vsel %vm1163, %v1099, %v1227
        %v1292 = vsel %vm1164, %v1100, %v1228
        %v1293 = vsel %vm1165, %v1101, %v1229
        %v1294 = vsel %vm1166, %v1102, %v1230
        %v1295 = vsel %vm1167, %v1103, %v1231
        %v1296 = vsel %vm1168, %v1104, %v1232
        %v1297 = vsel %vm1169, %v1105, %v1233
        %v1298 = vsel %vm1170, %v1106, %v1234
        %v1299 = vsel %vm1171, %v1107, %v1235
        %v1300 = vsel %vm1172, %v1108, %v1236
        %v1301 = vsel %vm1173, %v1109, %v1237
        %v1302 = vsel %vm1174, %v1110, %v1238
        %v1303 = vsel %vm1175, %v1111, %v1239
        %v1304 = vsel %vm1176, %v1112, %v1240
        %v1305 = vsel %vm1177, %v1113, %v1241
        %v1306 = vsel %vm1178, %v1114, %v1242
        %v1307 = vsel %vm1179, %v1115, %v1243
        %v1308 = vsel %vm1180, %v1116, %v1244
        %v1309 = vsel %vm1181, %v1117, %v1245
        %v1310 = vsel %vm1182, %v1118, %v1246
        %v1311 = vsel %vm1183, %v1119, %v1247
        %v1312 = vsel %vm1184, %v1120, %v1248
        %v1313 = vsel %vm1185, %v1121, %v1249
        %v1314 = vsel %vm1186, %v1122, %v1250
        %v1315 = vsel %vm1187, %v1123, %v1251
        %v1316 = vsel %vm1188, %v1124, %v1252
        %v1317 = vsel %vm1189, %v1125, %v1253
        %v1318 = vsel %vm1190, %v1126, %v1254
        %v1319 = vsel %vm1191, %v1127, %v1255
        %v1320 = vsel %vm1192, %v1128, %v1256
        %v1321 = vsel %vm1193, %v1129, %v1257
        %v1322 = vsel %vm1194, %v1130, %v1258
        %v1323 = vsel %vm1195, %v1131, %v1259
        %v1324 = vsel %vm1196, %v1132, %v1260
        %v1325 = vsel %vm1197, %v1133, %v1261
        %v1326 = vsel %vm1198, %v1134, %v1262
        %v1327 = vsel %vm1199, %v1135, %v1263
        %v1328 = vsel %vm1200, %v1136, %v1264
        %v1329 = vsel %vm1201, %v1137, %v1265
        %v1330 = vsel %vm1202, %v1138, %v1266
        %v1331 = vsel %vm1203, %v1139, %v1267
        %v1332 = vsel %vm1204, %v1140, %v1268
        %v1333 = vsel %vm1205, %v1141, %v1269
        %v1334 = vsel %vm1206, %v1142, %v1270
        %1335 = vst [vmem:[%s257] sm:$0xff] %v1271
        %1336 = vst [vmem:[%s257 + $0x8] sm:$0xff] %v1272
        %1337 = vst [vmem:[%s257 + $0x10] sm:$0xff] %v1273
        %1338 = vst [vmem:[%s257 + $0x18] sm:$0xff] %v1274
        %1339 = vst [vmem:[%s257 + $0x20] sm:$0xff] %v1275
        %1340 = vst [vmem:[%s257 + $0x28] sm:$0xff] %v1276
        %1341 = vst [vmem:[%s257 + $0x30] sm:$0xff] %v1277
        %1342 = vst [vmem:[%s257 + $0x38] sm:$0xff] %v1278
        %1343 = vst [vmem:[%s257 + $0x40] sm:$0xff] %v1279
        %1344 = vst [vmem:[%s257 + $0x48] sm:$0xff] %v1280
        %1345 = vst [vmem:[%s257 + $0x50] sm:$0xff] %v1281
        %1346 = vst [vmem:[%s257 + $0x58] sm:$0xff] %v1282
        %1347 = vst [vmem:[%s257 + $0x60] sm:$0xff] %v1283
        %1348 = vst [vmem:[%s257 + $0x68] sm:$0xff] %v1284
        %1349 = vst [vmem:[%s257 + $0x70] sm:$0xff] %v1285
        %1350 = vst [vmem:[%s257 + $0x78] sm:$0xff] %v1286
        %1351 = vst [vmem:[%s257 + $0x80] sm:$0xff] %v1287
        %1352 = vst [vmem:[%s257 + $0x88] sm:$0xff] %v1288
        %1353 = vst [vmem:[%s257 + $0x90] sm:$0xff] %v1289
        %1354 = vst [vmem:[%s257 + $0x98] sm:$0xff] %v1290
        %1355 = vst [vmem:[%s257 + $0xa0] sm:$0xff] %v1291
        %1356 = vst [vmem:[%s257 + $0xa8] sm:$0xff] %v1292
        %1357 = vst [vmem:[%s257 + $0xb0] sm:$0xff] %v1293
        %1358 = vst [vmem:[%s257 + $0xb8] sm:$0xff] %v1294
        %1359 = vst [vmem:[%s257 + $0xc0] sm:$0xff] %v1295
        %1360 = vst [vmem:[%s257 + $0xc8] sm:$0xff] %v1296
        %1361 = vst [vmem:[%s257 + $0xd0] sm:$0xff] %v1297
        %1362 = vst [vmem:[%s257 + $0xd8] sm:$0xff] %v1298
        %1363 = vst [vmem:[%s257 + $0xe0] sm:$0xff] %v1299
        %1364 = vst [vmem:[%s257 + $0xe8] sm:$0xff] %v1300
        %1365 = vst [vmem:[%s257 + $0xf0] sm:$0xff] %v1301
        %1366 = vst [vmem:[%s257 + $0xf8] sm:$0xff] %v1302
        %1367 = vst [vmem:[%s257 + $0x100] sm:$0xff] %v1303
        %1368 = vst [vmem:[%s257 + $0x108] sm:$0xff] %v1304
        %1369 = vst [vmem:[%s257 + $0x110] sm:$0xff] %v1305
        %1370 = vst [vmem:[%s257 + $0x118] sm:$0xff] %v1306
        %1371 = vst [vmem:[%s257 + $0x120] sm:$0xff] %v1307
        %1372 = vst [vmem:[%s257 + $0x128] sm:$0xff] %v1308
        %1373 = vst [vmem:[%s257 + $0x130] sm:$0xff] %v1309
        %1374 = vst [vmem:[%s257 + $0x138] sm:$0xff] %v1310
        %1375 = vst [vmem:[%s257 + $0x140] sm:$0xff] %v1311
        %1376 = vst [vmem:[%s257 + $0x148] sm:$0xff] %v1312
        %1377 = vst [vmem:[%s257 + $0x150] sm:$0xff] %v1313
        %1378 = vst [vmem:[%s257 + $0x158] sm:$0xff] %v1314
        %1379 = vst [vmem:[%s257 + $0x160] sm:$0xff] %v1315
        %1380 = vst [vmem:[%s257 + $0x168] sm:$0xff] %v1316
        %1381 = vst [vmem:[%s257 + $0x170] sm:$0xff] %v1317
        %1382 = vst [vmem:[%s257 + $0x178] sm:$0xff] %v1318
        %1383 = vst [vmem:[%s257 + $0x180] sm:$0xff] %v1319
        %1384 = vst [vmem:[%s257 + $0x188] sm:$0xff] %v1320
        %1385 = vst [vmem:[%s257 + $0x190] sm:$0xff] %v1321
        %1386 = vst [vmem:[%s257 + $0x198] sm:$0xff] %v1322
        %1387 = vst [vmem:[%s257 + $0x1a0] sm:$0xff] %v1323
        %1388 = vst [vmem:[%s257 + $0x1a8] sm:$0xff] %v1324
        %1389 = vst [vmem:[%s257 + $0x1b0] sm:$0xff] %v1325
        %1390 = vst [vmem:[%s257 + $0x1b8] sm:$0xff] %v1326
        %1391 = vst [vmem:[%s257 + $0x1c0] sm:$0xff] %v1327
        %1392 = vst [vmem:[%s257 + $0x1c8] sm:$0xff] %v1328
        %1393 = vst [vmem:[%s257 + $0x1d0] sm:$0xff] %v1329
        %1394 = vst [vmem:[%s257 + $0x1d8] sm:$0xff] %v1330
        %1395 = vst [vmem:[%s257 + $0x1e0] sm:$0xff] %v1331
        %1396 = vst [vmem:[%s257 + $0x1e8] sm:$0xff] %v1332
        %1397 = vst [vmem:[%s257 + $0x1f0] sm:$0xff] %v1333
        %1398 = vst [vmem:[%s257 + $0x1f8] sm:$0xff] %v1334
      $region40: #{_conv2d_impl.1} parent=31 // pred_fallthru
        _
      %s1399 = smul.u32 64, %s19
      %p1400 = scmp.lt.s32.totalorder %s1399, 2047
      %s1401 = scalar_select %p1400, %s1399, 2047
      %p1402 = scmp.lt.s32.totalorder %s20, 0
      %s1403 = scalar_select %p1402, %s20, 0
      %s1404 = sadd.s32 %s1403, %s1401
      %s1405 = smul.addr %s1404, 8
      %s1406 = scalar_lea.vmem %s3, %s1405
      // Predicated region
      $region41: #{_conv2d_impl.1} parent=31 // pred_check
        %p1407 = pneg %p135
      $region42: #{_conv2d_impl.1} parent=31 // pred_check_branch
        %1409 = sbr.rel (%p1407) target = $region44
      $region43: #{_conv2d_impl.1} parent=31 // pred_region
        %s1410 = smul.u32 64, %s19
      $region44: #{_conv2d_impl.1} parent=31 // pred_fallthru
        _
    $region32: #{_conv2d_impl.1} parent=5 // pred_fallthru
      _
    %p1411 = scmp.le.s32.totalorder 2, %s9
    // Predicated region
    $region45: #{_conv2d_impl.1} parent=5 // pred_check
      %p1412 = pneg %p1411
    $region46: #{_conv2d_impl.1} parent=5 // pred_check_branch
      %1414 = sbr.rel (%p1412) target = $region48
    $region47: #{_conv2d_impl.1} parent=5 // pred_region
      %s1415 = ssub.s32 %s9, 2
      // Predicated region
      $region49: #{_conv2d_impl.1} parent=47 // pred_check
        %p1416 = pneg %p141
      $region50: #{_conv2d_impl.1} parent=47 // pred_check_branch
        %1418 = sbr.rel (%p1416) target = $region52
      $region51: #{_conv2d_impl.1} parent=47 // pred_region
        %s1419 = smul.u32 64, %s22
        %p1420 = scmp.lt.s32.totalorder %s1419, 2047
        %s1421 = scalar_select %p1420, %s1419, 2047
        %p1422 = scmp.lt.s32.totalorder %s23, 0
        %s1423 = scalar_select %p1422, %s23, 0
        %s1424 = sadd.s32 %s1423, %s1421
        %s1425 = smul.addr %s1424, 8
        %s1426 = scalar_lea.vmem %s3, %s1425
      $region52: #{_conv2d_impl.1} parent=47 // pred_fallthru
        _
    $region48: #{_conv2d_impl.1} parent=5 // pred_fallthru
      _
  $region6: #{_conv2d_impl.1} parent=0 // loop_footer
    %s13 = sadd.s32 1, %s9
  $region7: #{_conv2d_impl.1} parent=0 // loop_footer_branch
    %8 = sbr.rel target = $region3
  $region8: #{_conv2d_impl.1} parent=0 // loop_exit
    _

</llo_original>
